<compile_context>
chip_gen: v5e
topology: v5e:2x2
jax: 0.10.0
libtpu: 0.0.40
codegen_flags: <defaults>
</compile_context>

<pallas_src>
import functools

import jax
import jax.numpy as jnp
from jax import lax
from jax.experimental import pallas as pl
from jax.experimental.pallas import tpu as pltpu


_C1, _C2, _C3 = 16, 32, 64  # AccentCNN channel widths


# ----------------------------------------------------------------------------
# Fused forward kernel: BB samples per grid step, everything stays in VMEM.
# ----------------------------------------------------------------------------
def _fused_forward_kernel(xp_ref,
                          w1_ref, s1_ref, t1_ref,
                          w2_ref, s2_ref, t2_ref,
                          w3_ref, s3_ref, t3_ref,
                          re1_ref, ro1_ref, ce1_ref, co1_ref,
                          re2_ref, ro2_ref, ce2_ref, co2_ref,
                          wf_ref, bf_ref,
                          out_ref,
                          *, BB, H, W):
    f32 = jnp.float32
    bf16 = jnp.bfloat16
    C1, C2, C3 = _C1, _C2, _C3
    H2, W2, H4, W4 = H // 2, W // 2, H // 4, W // 4
    M1 = BB * (H + 2) - 2   # conv-1 output rows (incl. junk rows at sample seams)
    M2 = BB * (H2 + 2) - 2
    M3 = BB * (H4 + 2) - 2

    def conv_bn_relu(xpad, w_ref, s_ref, t_ref, m):
        # 3 accumulated MXU dots (one per vertical tap). Horizontal taps and
        # horizontal zero padding are folded into the banded weight slab, so
        # every LHS slice is full lane width (row offsets 0/1/2 only).
        acc = jnp.dot(xpad[0:m, :], w_ref[0], preferred_element_type=f32)
        acc = acc + jnp.dot(xpad[1:m + 1, :], w_ref[1], preferred_element_type=f32)
        acc = acc + jnp.dot(xpad[2:m + 2, :], w_ref[2], preferred_element_type=f32)
        # Folded BatchNorm (eval running stats) + conv bias + ReLU.
        return jnp.maximum(acc * s_ref[...] + t_ref[...], 0.0)

    def maxpool_to_padded(y, re_ref, ro_ref, ce_ref, co_ref):
        # 2x2 stride-2 max pool via 0/1 selector matmuls. The row selectors
        # also (a) drop the junk rows at sample boundaries and (b) scatter the
        # result directly into the next layer's vertically zero-padded row
        # layout (their border rows are all-zero), so no pad scratch, zeroing
        # or interior stores are needed between layers.
        yb = y.astype(bf16)
        rows = jnp.maximum(
            jnp.dot(re_ref[...], yb, preferred_element_type=f32),
            jnp.dot(ro_ref[...], yb, preferred_element_type=f32))
        rb = rows.astype(bf16)
        return jnp.maximum(
            jnp.dot(rb, ce_ref[...], preferred_element_type=f32),
            jnp.dot(rb, co_ref[...], preferred_element_type=f32))

    # ---- layer 1: conv(1->16) + BN + ReLU + maxpool(2,2) ---------------------
    xp = xp_ref[...]                                              # (BB*(H+2), W) bf16
    y1 = conv_bn_relu(xp, w1_ref, s1_ref, t1_ref, M1)             # (M1, W*C1)   f32
    p1 = maxpool_to_padded(y1, re1_ref, ro1_ref, ce1_ref, co1_ref)
    #                                                             # (BB*(H2+2), W2*C1)

    # ---- layer 2: conv(16->32) + BN + ReLU + maxpool(2,2) --------------------
    y2 = conv_bn_relu(p1.astype(bf16), w2_ref, s2_ref, t2_ref, M2)   # (M2, W2*C2)
    p2 = maxpool_to_padded(y2, re2_ref, ro2_ref, ce2_ref, co2_ref)
    #                                                             # (BB*(H4+2), W4*C2)

    # ---- layer 3: conv(32->64) + BN + ReLU + adaptive (1,1) max pool ---------
    y3 = conv_bn_relu(p2.astype(bf16), w3_ref, s3_ref, t3_ref, M3)   # (M3, W4*C3)

    feat = y3[:, 0:C3]
    for j in range(1, W4):                                        # max over width
        feat = jnp.maximum(feat, y3[:, j * C3:(j + 1) * C3])      # (M3, C3)
    per_sample = []
    for b in range(BB):                                           # max over height
        blk = feat[b * (H4 + 2):b * (H4 + 2) + H4, :]             # valid rows only
        per_sample.append(jnp.max(blk, axis=0, keepdims=True))
    gfeat = jnp.concatenate(per_sample, axis=0)                   # (BB, C3) f32

    # ---- fc (dropout p=0.3 is identity in eval mode) -------------------------
    # TODO(synk): training-mode stochastic dropout is intentionally not implemented.
    out_ref[...] = (jnp.dot(gfeat, wf_ref[...], preferred_element_type=f32)
                    + bf_ref[...])


# ----------------------------------------------------------------------------
# Host-side constant preparation (pure XLA, done once per forward)
# ----------------------------------------------------------------------------
def _fold_bn(conv_bias, gamma, beta, mean, var, eps=1e-5):
    scale = gamma / jnp.sqrt(var + eps)
    shift = scale * (conv_bias - mean) + beta
    return scale, shift


def _banded_conv_weight(w_oihw, width, dtype):
    """(Cout, Cin, 3, 3) torch conv weight -> (3, width*Cin, width*Cout).

    For each vertical tap dh the slab maps input columns (win*Cin + ci) to
    output columns (wout*Cout + co) with the 3 horizontal taps folded into a
    band of width 3; entries that would read the horizontal zero padding are
    dropped (band truncates at the edges), so no horizontal pad is ever built.
    """
    wt = jnp.transpose(w_oihw, (2, 3, 1, 0))                      # (dh, dw, cin, cout)
    delta = jnp.arange(width)[:, None] - jnp.arange(width)[None, :] + 1   # win - wout + 1
    valid = (delta >= 0) & (delta <= 2)
    band = wt[:, jnp.clip(delta, 0, 2)]                           # (3, win, wout, cin, cout)
    band = band * valid[None, :, :, None, None].astype(wt.dtype)
    band = jnp.transpose(band, (0, 1, 3, 2, 4))                   # (3, win, cin, wout, cout)
    cin, cout = int(w_oihw.shape[1]), int(w_oihw.shape[0])
    return band.reshape(3, width * cin, width * cout).astype(dtype)


def _row_pool_selectors(bb, h_in, h_out, dtype):
    """0/1 row-pair selectors of shape (bb*(h_out+2), bb*(h_in+2)-2).

    Output row b*(h_out+2)+1+r selects conv row b*(h_in+2)+2r (even) /
    +2r+1 (odd); border rows are all-zero so the result lands directly in the
    next layer's vertically zero-padded layout, and the junk rows at sample
    boundaries are never selected.
    """
    m_in = bb * (h_in + 2) - 2
    oi = jnp.arange(bb * (h_out + 2))
    b = oi // (h_out + 2)
    r = oi % (h_out + 2)
    interior = (r >= 1) & (r <= h_out)
    src_even = b * (h_in + 2) + 2 * (r - 1)
    cols = jnp.arange(m_in)
    re = ((cols[None, :] == src_even[:, None]) & interior[:, None]).astype(dtype)
    ro = ((cols[None, :] == (src_even + 1)[:, None]) & interior[:, None]).astype(dtype)
    return re, ro


def _col_pool_selectors(width, c, dtype):
    """0/1 column-pair selectors of shape (width*c, (width//2)*c)."""
    w2 = width // 2
    src = jnp.arange(width * c)
    dst = jnp.arange(w2 * c)
    same_c = (src[:, None] % c) == (dst[None, :] % c)
    ce = (((src[:, None] // c) == 2 * (dst[None, :] // c)) & same_c).astype(dtype)
    co = (((src[:, None] // c) == 2 * (dst[None, :] // c) + 1) & same_c).astype(dtype)
    return ce, co


def _pick_batch_block(b):
    # Batch BB samples per grid step so the matmul M dimension is well filled.
    if b <= 32:
        return b                              # one step, block == full array
    for cand in (32, 24, 16, 8):              # multiples of 8 keep blocks aligned
        if b % cand == 0:
            return cand
    return b


# ----------------------------------------------------------------------------
# Forward pass (inference semantics of AccentCNN.forward)
# ----------------------------------------------------------------------------
def accent_cnn_forward(x_nchw, params, *, batch_block=None,
                       dimension_semantics=("parallel",)):
    x = x_nchw.astype(jnp.float32)
    B, cin, H, W = x.shape
    assert cin == 1 and H % 4 == 0 and W % 4 == 0, (cin, H, W)
    C1, C2, C3 = _C1, _C2, _C3
    H2, W2, H4, W4 = H // 2, W // 2, H // 4, W // 4
    nc = int(params["fc_w"].shape[1])
    bf16 = jnp.bfloat16

    BB = batch_block if batch_block is not None else _pick_batch_block(B)
    assert B % BB == 0, (B, BB)
    grid = (B // BB,)

    # --- constants: banded conv weights (bf16), folded BN scale/shift (f32),
    # --- pool selectors (bf16), fc weight/bias (f32).
    consts = []
    for li, (c_out, width) in enumerate([(C1, W), (C2, W2), (C3, W4)], start=1):
        wb = _banded_conv_weight(params[f"conv{li}_w"], width, bf16)
        scale, shift = _fold_bn(params[f"conv{li}_b"], params[f"bn{li}_gamma"],
                                params[f"bn{li}_beta"], params[f"bn{li}_mean"],
                                params[f"bn{li}_var"])
        consts += [wb,
                   jnp.tile(scale, width).reshape(1, width * c_out),
                   jnp.tile(shift, width).reshape(1, width * c_out)]
    re1, ro1 = _row_pool_selectors(BB, H, H2, bf16)
    ce1, co1 = _col_pool_selectors(W, C1, bf16)
    re2, ro2 = _row_pool_selectors(BB, H2, H4, bf16)
    ce2, co2 = _col_pool_selectors(W2, C2, bf16)
    wf = params["fc_w"].astype(jnp.float32)                       # (64, num_classes)
    bf = params["fc_b"].reshape(1, nc).astype(jnp.float32)

    const_inputs = consts + [re1, ro1, ce1, co1, re2, ro2, ce2, co2, wf, bf]
    const_specs = [
        pl.BlockSpec(tuple(c.shape), (lambda nd: (lambda i: (0,) * nd))(c.ndim))
        for c in const_inputs]

    # --- input: vertical zero padding materialized once on the host; BB padded
    # --- per-sample row groups are stacked along the matmul M dimension.
    xp = jnp.pad(x[:, 0], ((0, 0), (1, 1), (0, 0)))               # (B, H+2, W)
    xp = xp.reshape(B * (H + 2), W).astype(bf16)

    # --- VMEM budget: constants/input/output double-buffered + live activations.
    const_bytes = sum(int(c.size) * c.dtype.itemsize for c in const_inputs)
    m1, m2, m3 = BB * (H + 2) - 2, BB * (H2 + 2) - 2, BB * (H4 + 2) - 2
    act_bytes = 4 * (m1 * W * C1 + BB * (H2 + 2) * (W * C1 + W2 * C1)
                     + m2 * W2 * C2 + BB * (H4 + 2) * (W2 * C2 + W4 * C2)
                     + m3 * W4 * C3)
    io_bytes = 2 * (BB * (H + 2) * W * 2 + BB * nc * 4)
    vmem_limit = int(min(max(3 * (2 * const_bytes + act_bytes + io_bytes),
                             32 * 2 ** 20), 64 * 2 ** 20))

    kern = functools.partial(_fused_forward_kernel, BB=BB, H=H, W=W)
    out = pl.pallas_call(
        kern,
        out_shape=jax.ShapeDtypeStruct((B, nc), jnp.float32),
        grid=grid,
        in_specs=[pl.BlockSpec((BB * (H + 2), W), lambda i: (i, 0))] + const_specs,
        out_specs=pl.BlockSpec((BB, nc), lambda i: (i, 0)),
        compiler_params=pltpu.CompilerParams(
            # On v7x pass dimension_semantics=(pltpu.CORE_PARALLEL,) to shard
            # the batch-block axis across the two TensorCores.
            dimension_semantics=dimension_semantics,
            vmem_limit_bytes=vmem_limit),
    )(xp, *const_inputs)
    return out


# ----------------------------------------------------------------------------
# Pure-JAX reference (eval-mode AccentCNN.forward) for correctness checking
# ----------------------------------------------------------------------------
def accent_cnn_reference(x_nchw, params, eps=1e-5):
    x = x_nchw.astype(jnp.float32)

    def block(h, li):
        w, b = params[f"conv{li}_w"], params[f"conv{li}_b"]
        h = lax.conv_general_dilated(h, w, (1, 1), "SAME",
                                     dimension_numbers=("NCHW", "OIHW", "NCHW"))
        h = h + b[None, :, None, None]
        scale = params[f"bn{li}_gamma"] / jnp.sqrt(params[f"bn{li}_var"] + eps)
        h = (scale[None, :, None, None]
             * (h - params[f"bn{li}_mean"][None, :, None, None])
             + params[f"bn{li}_beta"][None, :, None, None])
        return jnp.maximum(h, 0.0)

    def pool2(h):
        return lax.reduce_window(h, -jnp.inf, lax.max,
                                 (1, 1, 2, 2), (1, 1, 2, 2), "VALID")

    h = pool2(block(x, 1))
    h = pool2(block(h, 2))
    h = block(h, 3)
    h = jnp.max(h, axis=(2, 3))                     # AdaptiveMaxPool2d((1, 1))
    return h @ params["fc_w"] + params["fc_b"]      # dropout == identity (eval)


# ----------------------------------------------------------------------------
# Parameters (deterministic synthetic init matching the module's shapes)
# ----------------------------------------------------------------------------
def init_params(key, num_classes):
    ks = jax.random.split(key, 8)
    p = {}
    cfg = [(1, _C1), (_C1, _C2), (_C2, _C3)]
    for li, (cin, cout) in enumerate(cfg, start=1):
        p[f"conv{li}_w"] = 0.1 * jax.random.normal(
            ks[2 * (li - 1)], (cout, cin, 3, 3), jnp.float32)     # torch OIHW layout
        p[f"conv{li}_b"] = 0.1 * jax.random.normal(
            ks[2 * (li - 1) + 1], (cout,), jnp.float32)
        # BatchNorm2d eval-mode defaults: gamma=1, beta=0, running mean=0, var=1
        p[f"bn{li}_gamma"] = jnp.ones((cout,), jnp.float32)
        p[f"bn{li}_beta"] = jnp.zeros((cout,), jnp.float32)
        p[f"bn{li}_mean"] = jnp.zeros((cout,), jnp.float32)
        p[f"bn{li}_var"] = jnp.ones((cout,), jnp.float32)
    p["fc_w"] = 0.1 * jax.random.normal(ks[6], (_C3, num_classes), jnp.float32)
    p["fc_b"] = 0.1 * jax.random.normal(ks[7], (num_classes,), jnp.float32)
    return p


if __name__ == "__main__":
    B, NUM_MFCC, T = 2, 16, 16            # input: (B, 1, num_mfcc, time)
    NUM_CLASSES = 5
    key = jax.random.PRNGKey(0)
    k_x, k_p = jax.random.split(key)
    x = jax.random.normal(k_x, (B, 1, NUM_MFCC, T), jnp.float32)
    params = init_params(k_p, NUM_CLASSES)

    fwd = jax.jit(accent_cnn_forward)
    logits = jax.block_until_ready(fwd(x, params))
    assert logits.shape == (B, NUM_CLASSES), logits.shape

    ref = jax.block_until_ready(jax.jit(accent_cnn_reference)(x, params))
    assert jnp.allclose(logits, ref, rtol=5e-2, atol=5e-2), (logits, ref)
    print("KERNEL_OK")
</pallas_src>

<mosaic_0001>
module attributes {stable_mosaic.version = 11 : i64} {
  func.func @_fused_forward_kernel(%arg0: i32, %arg1: memref<36x16xbf16, #tpu.memory_space<vmem>>, %arg2: memref<3x16x256xbf16, #tpu.memory_space<vmem>>, %arg3: memref<1x256xf32, #tpu.memory_space<vmem>>, %arg4: memref<1x256xf32, #tpu.memory_space<vmem>>, %arg5: memref<3x128x256xbf16, #tpu.memory_space<vmem>>, %arg6: memref<1x256xf32, #tpu.memory_space<vmem>>, %arg7: memref<1x256xf32, #tpu.memory_space<vmem>>, %arg8: memref<3x128x256xbf16, #tpu.memory_space<vmem>>, %arg9: memref<1x256xf32, #tpu.memory_space<vmem>>, %arg10: memref<1x256xf32, #tpu.memory_space<vmem>>, %arg11: memref<20x34xbf16, #tpu.memory_space<vmem>>, %arg12: memref<20x34xbf16, #tpu.memory_space<vmem>>, %arg13: memref<256x128xbf16, #tpu.memory_space<vmem>>, %arg14: memref<256x128xbf16, #tpu.memory_space<vmem>>, %arg15: memref<12x18xbf16, #tpu.memory_space<vmem>>, %arg16: memref<12x18xbf16, #tpu.memory_space<vmem>>, %arg17: memref<256x128xbf16, #tpu.memory_space<vmem>>, %arg18: memref<256x128xbf16, #tpu.memory_space<vmem>>, %arg19: memref<64x5xf32, #tpu.memory_space<vmem>>, %arg20: memref<1x5xf32, #tpu.memory_space<vmem>>, %arg21: memref<2x5xf32, #tpu.memory_space<vmem>>) attributes {dimension_semantics = [#tpu.dimension_semantics<parallel>], iteration_bounds = array<i64: 1>, scalar_prefetch = 0 : i64, scratch_operands = 0 : i64, tpu.core_type = #tpu.core_type<tc>, window_params = [{transform_indices = @transform_0, window_bounds = array<i64: 36, 16>}, {pipeline_mode = #tpu.pipeline_mode<synchronous>, transform_indices = @transform_1, window_bounds = array<i64: 3, 16, 256>}, {pipeline_mode = #tpu.pipeline_mode<synchronous>, transform_indices = @transform_2, window_bounds = array<i64: 1, 256>}, {pipeline_mode = #tpu.pipeline_mode<synchronous>, transform_indices = @transform_3, window_bounds = array<i64: 1, 256>}, {pipeline_mode = #tpu.pipeline_mode<synchronous>, transform_indices = @transform_4, window_bounds = array<i64: 3, 128, 256>}, {pipeline_mode = #tpu.pipeline_mode<synchronous>, transform_indices = @transform_5, window_bounds = array<i64: 1, 256>}, {pipeline_mode = #tpu.pipeline_mode<synchronous>, transform_indices = @transform_6, window_bounds = array<i64: 1, 256>}, {pipeline_mode = #tpu.pipeline_mode<synchronous>, transform_indices = @transform_7, window_bounds = array<i64: 3, 128, 256>}, {pipeline_mode = #tpu.pipeline_mode<synchronous>, transform_indices = @transform_8, window_bounds = array<i64: 1, 256>}, {pipeline_mode = #tpu.pipeline_mode<synchronous>, transform_indices = @transform_9, window_bounds = array<i64: 1, 256>}, {pipeline_mode = #tpu.pipeline_mode<synchronous>, transform_indices = @transform_10, window_bounds = array<i64: 20, 34>}, {pipeline_mode = #tpu.pipeline_mode<synchronous>, transform_indices = @transform_11, window_bounds = array<i64: 20, 34>}, {pipeline_mode = #tpu.pipeline_mode<synchronous>, transform_indices = @transform_12, window_bounds = array<i64: 256, 128>}, {pipeline_mode = #tpu.pipeline_mode<synchronous>, transform_indices = @transform_13, window_bounds = array<i64: 256, 128>}, {pipeline_mode = #tpu.pipeline_mode<synchronous>, transform_indices = @transform_14, window_bounds = array<i64: 12, 18>}, {pipeline_mode = #tpu.pipeline_mode<synchronous>, transform_indices = @transform_15, window_bounds = array<i64: 12, 18>}, {pipeline_mode = #tpu.pipeline_mode<synchronous>, transform_indices = @transform_16, window_bounds = array<i64: 256, 128>}, {pipeline_mode = #tpu.pipeline_mode<synchronous>, transform_indices = @transform_17, window_bounds = array<i64: 256, 128>}, {pipeline_mode = #tpu.pipeline_mode<synchronous>, transform_indices = @transform_18, window_bounds = array<i64: 64, 5>}, {pipeline_mode = #tpu.pipeline_mode<synchronous>, transform_indices = @transform_19, window_bounds = array<i64: 1, 5>}, {transform_indices = @transform_20, window_bounds = array<i64: 2, 5>}]} {
    %c0 = arith.constant 0 : index
    %c0_0 = arith.constant 0 : index
    %0 = vector.load %arg1[%c0, %c0_0] : memref<36x16xbf16, #tpu.memory_space<vmem>>, vector<36x16xbf16>
    %1 = vector.extract_strided_slice %0 {offsets = [0, 0], sizes = [34, 16], strides = [1, 1]} : vector<36x16xbf16> to vector<34x16xbf16>
    %c0_1 = arith.constant 0 : index
    %c0_2 = arith.constant 0 : index
    %c0_3 = arith.constant 0 : index
    %2 = vector.load %arg2[%c0_1, %c0_2, %c0_3] : memref<3x16x256xbf16, #tpu.memory_space<vmem>>, vector<1x16x256xbf16>
    %3 = vector.shape_cast %2 : vector<1x16x256xbf16> to vector<16x256xbf16>
    %cst = arith.constant dense<0.000000e+00> : vector<34x256xf32>
    %4 = tpu.matmul %1, %3, %cst {dimension_numbers = #tpu.dot_dimension_numbers<[1], [0], [0], [1], [0, 0, 1, 1], [], []>} : vector<34x16xbf16>, vector<16x256xbf16>, vector<34x256xf32> -> vector<34x256xf32>
    %5 = vector.extract_strided_slice %0 {offsets = [1, 0], sizes = [34, 16], strides = [1, 1]} : vector<36x16xbf16> to vector<34x16xbf16>
    %c1 = arith.constant 1 : index
    %c0_4 = arith.constant 0 : index
    %c0_5 = arith.constant 0 : index
    %6 = vector.load %arg2[%c1, %c0_4, %c0_5] : memref<3x16x256xbf16, #tpu.memory_space<vmem>>, vector<1x16x256xbf16>
    %7 = vector.shape_cast %6 : vector<1x16x256xbf16> to vector<16x256xbf16>
    %cst_6 = arith.constant dense<0.000000e+00> : vector<34x256xf32>
    %8 = tpu.matmul %5, %7, %cst_6 {dimension_numbers = #tpu.dot_dimension_numbers<[1], [0], [0], [1], [0, 0, 1, 1], [], []>} : vector<34x16xbf16>, vector<16x256xbf16>, vector<34x256xf32> -> vector<34x256xf32>
    %9 = arith.addf %4, %8 : vector<34x256xf32>
    %10 = vector.extract_strided_slice %0 {offsets = [2, 0], sizes = [34, 16], strides = [1, 1]} : vector<36x16xbf16> to vector<34x16xbf16>
    %c2 = arith.constant 2 : index
    %c0_7 = arith.constant 0 : index
    %c0_8 = arith.constant 0 : index
    %11 = vector.load %arg2[%c2, %c0_7, %c0_8] : memref<3x16x256xbf16, #tpu.memory_space<vmem>>, vector<1x16x256xbf16>
    %12 = vector.shape_cast %11 : vector<1x16x256xbf16> to vector<16x256xbf16>
    %cst_9 = arith.constant dense<0.000000e+00> : vector<34x256xf32>
    %13 = tpu.matmul %10, %12, %cst_9 {dimension_numbers = #tpu.dot_dimension_numbers<[1], [0], [0], [1], [0, 0, 1, 1], [], []>} : vector<34x16xbf16>, vector<16x256xbf16>, vector<34x256xf32> -> vector<34x256xf32>
    %14 = arith.addf %9, %13 : vector<34x256xf32>
    %c0_10 = arith.constant 0 : index
    %c0_11 = arith.constant 0 : index
    %15 = vector.load %arg3[%c0_10, %c0_11] : memref<1x256xf32, #tpu.memory_space<vmem>>, vector<1x256xf32>
    %16 = vector.broadcast %15 : vector<1x256xf32> to vector<34x256xf32>
    %17 = arith.mulf %14, %16 : vector<34x256xf32>
    %c0_12 = arith.constant 0 : index
    %c0_13 = arith.constant 0 : index
    %18 = vector.load %arg4[%c0_12, %c0_13] : memref<1x256xf32, #tpu.memory_space<vmem>>, vector<1x256xf32>
    %19 = vector.broadcast %18 : vector<1x256xf32> to vector<34x256xf32>
    %20 = arith.addf %17, %19 : vector<34x256xf32>
    %cst_14 = arith.constant 0.000000e+00 : f32
    %21 = vector.broadcast %cst_14 : f32 to vector<34x256xf32>
    %22 = arith.maximumf %20, %21 : vector<34x256xf32>
    %23 = arith.truncf %22 : vector<34x256xf32> to vector<34x256xbf16>
    %c0_15 = arith.constant 0 : index
    %c0_16 = arith.constant 0 : index
    %24 = vector.load %arg11[%c0_15, %c0_16] : memref<20x34xbf16, #tpu.memory_space<vmem>>, vector<20x34xbf16>
    %cst_17 = arith.constant dense<0.000000e+00> : vector<20x256xf32>
    %25 = tpu.matmul %24, %23, %cst_17 {dimension_numbers = #tpu.dot_dimension_numbers<[1], [0], [0], [1], [0, 0, 1, 1], [], []>} : vector<20x34xbf16>, vector<34x256xbf16>, vector<20x256xf32> -> vector<20x256xf32>
    %c0_18 = arith.constant 0 : index
    %c0_19 = arith.constant 0 : index
    %26 = vector.load %arg12[%c0_18, %c0_19] : memref<20x34xbf16, #tpu.memory_space<vmem>>, vector<20x34xbf16>
    %cst_20 = arith.constant dense<0.000000e+00> : vector<20x256xf32>
    %27 = tpu.matmul %26, %23, %cst_20 {dimension_numbers = #tpu.dot_dimension_numbers<[1], [0], [0], [1], [0, 0, 1, 1], [], []>} : vector<20x34xbf16>, vector<34x256xbf16>, vector<20x256xf32> -> vector<20x256xf32>
    %28 = arith.maximumf %25, %27 : vector<20x256xf32>
    %29 = arith.truncf %28 : vector<20x256xf32> to vector<20x256xbf16>
    %c0_21 = arith.constant 0 : index
    %c0_22 = arith.constant 0 : index
    %30 = vector.load %arg13[%c0_21, %c0_22] : memref<256x128xbf16, #tpu.memory_space<vmem>>, vector<256x128xbf16>
    %cst_23 = arith.constant dense<0.000000e+00> : vector<20x128xf32>
    %31 = tpu.matmul %29, %30, %cst_23 {dimension_numbers = #tpu.dot_dimension_numbers<[1], [0], [0], [1], [0, 0, 1, 1], [], []>} : vector<20x256xbf16>, vector<256x128xbf16>, vector<20x128xf32> -> vector<20x128xf32>
    %c0_24 = arith.constant 0 : index
    %c0_25 = arith.constant 0 : index
    %32 = vector.load %arg14[%c0_24, %c0_25] : memref<256x128xbf16, #tpu.memory_space<vmem>>, vector<256x128xbf16>
    %cst_26 = arith.constant dense<0.000000e+00> : vector<20x128xf32>
    %33 = tpu.matmul %29, %32, %cst_26 {dimension_numbers = #tpu.dot_dimension_numbers<[1], [0], [0], [1], [0, 0, 1, 1], [], []>} : vector<20x256xbf16>, vector<256x128xbf16>, vector<20x128xf32> -> vector<20x128xf32>
    %34 = arith.maximumf %31, %33 : vector<20x128xf32>
    %35 = arith.truncf %34 : vector<20x128xf32> to vector<20x128xbf16>
    %36 = vector.extract_strided_slice %35 {offsets = [0, 0], sizes = [18, 128], strides = [1, 1]} : vector<20x128xbf16> to vector<18x128xbf16>
    %c0_27 = arith.constant 0 : index
    %c0_28 = arith.constant 0 : index
    %c0_29 = arith.constant 0 : index
    %37 = vector.load %arg5[%c0_27, %c0_28, %c0_29] : memref<3x128x256xbf16, #tpu.memory_space<vmem>>, vector<1x128x256xbf16>
    %38 = vector.shape_cast %37 : vector<1x128x256xbf16> to vector<128x256xbf16>
    %cst_30 = arith.constant dense<0.000000e+00> : vector<18x256xf32>
    %39 = tpu.matmul %36, %38, %cst_30 {dimension_numbers = #tpu.dot_dimension_numbers<[1], [0], [0], [1], [0, 0, 1, 1], [], []>} : vector<18x128xbf16>, vector<128x256xbf16>, vector<18x256xf32> -> vector<18x256xf32>
    %40 = vector.extract_strided_slice %35 {offsets = [1, 0], sizes = [18, 128], strides = [1, 1]} : vector<20x128xbf16> to vector<18x128xbf16>
    %c1_31 = arith.constant 1 : index
    %c0_32 = arith.constant 0 : index
    %c0_33 = arith.constant 0 : index
    %41 = vector.load %arg5[%c1_31, %c0_32, %c0_33] : memref<3x128x256xbf16, #tpu.memory_space<vmem>>, vector<1x128x256xbf16>
    %42 = vector.shape_cast %41 : vector<1x128x256xbf16> to vector<128x256xbf16>
    %cst_34 = arith.constant dense<0.000000e+00> : vector<18x256xf32>
    %43 = tpu.matmul %40, %42, %cst_34 {dimension_numbers = #tpu.dot_dimension_numbers<[1], [0], [0], [1], [0, 0, 1, 1], [], []>} : vector<18x128xbf16>, vector<128x256xbf16>, vector<18x256xf32> -> vector<18x256xf32>
    %44 = arith.addf %39, %43 : vector<18x256xf32>
    %45 = vector.extract_strided_slice %35 {offsets = [2, 0], sizes = [18, 128], strides = [1, 1]} : vector<20x128xbf16> to vector<18x128xbf16>
    %c2_35 = arith.constant 2 : index
    %c0_36 = arith.constant 0 : index
    %c0_37 = arith.constant 0 : index
    %46 = vector.load %arg5[%c2_35, %c0_36, %c0_37] : memref<3x128x256xbf16, #tpu.memory_space<vmem>>, vector<1x128x256xbf16>
    %47 = vector.shape_cast %46 : vector<1x128x256xbf16> to vector<128x256xbf16>
    %cst_38 = arith.constant dense<0.000000e+00> : vector<18x256xf32>
    %48 = tpu.matmul %45, %47, %cst_38 {dimension_numbers = #tpu.dot_dimension_numbers<[1], [0], [0], [1], [0, 0, 1, 1], [], []>} : vector<18x128xbf16>, vector<128x256xbf16>, vector<18x256xf32> -> vector<18x256xf32>
    %49 = arith.addf %44, %48 : vector<18x256xf32>
    %c0_39 = arith.constant 0 : index
    %c0_40 = arith.constant 0 : index
    %50 = vector.load %arg6[%c0_39, %c0_40] : memref<1x256xf32, #tpu.memory_space<vmem>>, vector<1x256xf32>
    %51 = vector.broadcast %50 : vector<1x256xf32> to vector<18x256xf32>
    %52 = arith.mulf %49, %51 : vector<18x256xf32>
    %c0_41 = arith.constant 0 : index
    %c0_42 = arith.constant 0 : index
    %53 = vector.load %arg7[%c0_41, %c0_42] : memref<1x256xf32, #tpu.memory_space<vmem>>, vector<1x256xf32>
    %54 = vector.broadcast %53 : vector<1x256xf32> to vector<18x256xf32>
    %55 = arith.addf %52, %54 : vector<18x256xf32>
    %cst_43 = arith.constant 0.000000e+00 : f32
    %56 = vector.broadcast %cst_43 : f32 to vector<18x256xf32>
    %57 = arith.maximumf %55, %56 : vector<18x256xf32>
    %58 = arith.truncf %57 : vector<18x256xf32> to vector<18x256xbf16>
    %c0_44 = arith.constant 0 : index
    %c0_45 = arith.constant 0 : index
    %59 = vector.load %arg15[%c0_44, %c0_45] : memref<12x18xbf16, #tpu.memory_space<vmem>>, vector<12x18xbf16>
    %cst_46 = arith.constant dense<0.000000e+00> : vector<12x256xf32>
    %60 = tpu.matmul %59, %58, %cst_46 {dimension_numbers = #tpu.dot_dimension_numbers<[1], [0], [0], [1], [0, 0, 1, 1], [], []>} : vector<12x18xbf16>, vector<18x256xbf16>, vector<12x256xf32> -> vector<12x256xf32>
    %c0_47 = arith.constant 0 : index
    %c0_48 = arith.constant 0 : index
    %61 = vector.load %arg16[%c0_47, %c0_48] : memref<12x18xbf16, #tpu.memory_space<vmem>>, vector<12x18xbf16>
    %cst_49 = arith.constant dense<0.000000e+00> : vector<12x256xf32>
    %62 = tpu.matmul %61, %58, %cst_49 {dimension_numbers = #tpu.dot_dimension_numbers<[1], [0], [0], [1], [0, 0, 1, 1], [], []>} : vector<12x18xbf16>, vector<18x256xbf16>, vector<12x256xf32> -> vector<12x256xf32>
    %63 = arith.maximumf %60, %62 : vector<12x256xf32>
    %64 = arith.truncf %63 : vector<12x256xf32> to vector<12x256xbf16>
    %c0_50 = arith.constant 0 : index
    %c0_51 = arith.constant 0 : index
    %65 = vector.load %arg17[%c0_50, %c0_51] : memref<256x128xbf16, #tpu.memory_space<vmem>>, vector<256x128xbf16>
    %cst_52 = arith.constant dense<0.000000e+00> : vector<12x128xf32>
    %66 = tpu.matmul %64, %65, %cst_52 {dimension_numbers = #tpu.dot_dimension_numbers<[1], [0], [0], [1], [0, 0, 1, 1], [], []>} : vector<12x256xbf16>, vector<256x128xbf16>, vector<12x128xf32> -> vector<12x128xf32>
    %c0_53 = arith.constant 0 : index
    %c0_54 = arith.constant 0 : index
    %67 = vector.load %arg18[%c0_53, %c0_54] : memref<256x128xbf16, #tpu.memory_space<vmem>>, vector<256x128xbf16>
    %cst_55 = arith.constant dense<0.000000e+00> : vector<12x128xf32>
    %68 = tpu.matmul %64, %67, %cst_55 {dimension_numbers = #tpu.dot_dimension_numbers<[1], [0], [0], [1], [0, 0, 1, 1], [], []>} : vector<12x256xbf16>, vector<256x128xbf16>, vector<12x128xf32> -> vector<12x128xf32>
    %69 = arith.maximumf %66, %68 : vector<12x128xf32>
    %70 = arith.truncf %69 : vector<12x128xf32> to vector<12x128xbf16>
    %71 = vector.extract_strided_slice %70 {offsets = [0, 0], sizes = [10, 128], strides = [1, 1]} : vector<12x128xbf16> to vector<10x128xbf16>
    %c0_56 = arith.constant 0 : index
    %c0_57 = arith.constant 0 : index
    %c0_58 = arith.constant 0 : index
    %72 = vector.load %arg8[%c0_56, %c0_57, %c0_58] : memref<3x128x256xbf16, #tpu.memory_space<vmem>>, vector<1x128x256xbf16>
    %73 = vector.shape_cast %72 : vector<1x128x256xbf16> to vector<128x256xbf16>
    %cst_59 = arith.constant dense<0.000000e+00> : vector<10x256xf32>
    %74 = tpu.matmul %71, %73, %cst_59 {dimension_numbers = #tpu.dot_dimension_numbers<[1], [0], [0], [1], [0, 0, 1, 1], [], []>} : vector<10x128xbf16>, vector<128x256xbf16>, vector<10x256xf32> -> vector<10x256xf32>
    %75 = vector.extract_strided_slice %70 {offsets = [1, 0], sizes = [10, 128], strides = [1, 1]} : vector<12x128xbf16> to vector<10x128xbf16>
    %c1_60 = arith.constant 1 : index
    %c0_61 = arith.constant 0 : index
    %c0_62 = arith.constant 0 : index
    %76 = vector.load %arg8[%c1_60, %c0_61, %c0_62] : memref<3x128x256xbf16, #tpu.memory_space<vmem>>, vector<1x128x256xbf16>
    %77 = vector.shape_cast %76 : vector<1x128x256xbf16> to vector<128x256xbf16>
    %cst_63 = arith.constant dense<0.000000e+00> : vector<10x256xf32>
    %78 = tpu.matmul %75, %77, %cst_63 {dimension_numbers = #tpu.dot_dimension_numbers<[1], [0], [0], [1], [0, 0, 1, 1], [], []>} : vector<10x128xbf16>, vector<128x256xbf16>, vector<10x256xf32> -> vector<10x256xf32>
    %79 = arith.addf %74, %78 : vector<10x256xf32>
    %80 = vector.extract_strided_slice %70 {offsets = [2, 0], sizes = [10, 128], strides = [1, 1]} : vector<12x128xbf16> to vector<10x128xbf16>
    %c2_64 = arith.constant 2 : index
    %c0_65 = arith.constant 0 : index
    %c0_66 = arith.constant 0 : index
    %81 = vector.load %arg8[%c2_64, %c0_65, %c0_66] : memref<3x128x256xbf16, #tpu.memory_space<vmem>>, vector<1x128x256xbf16>
    %82 = vector.shape_cast %81 : vector<1x128x256xbf16> to vector<128x256xbf16>
    %cst_67 = arith.constant dense<0.000000e+00> : vector<10x256xf32>
    %83 = tpu.matmul %80, %82, %cst_67 {dimension_numbers = #tpu.dot_dimension_numbers<[1], [0], [0], [1], [0, 0, 1, 1], [], []>} : vector<10x128xbf16>, vector<128x256xbf16>, vector<10x256xf32> -> vector<10x256xf32>
    %84 = arith.addf %79, %83 : vector<10x256xf32>
    %c0_68 = arith.constant 0 : index
    %c0_69 = arith.constant 0 : index
    %85 = vector.load %arg9[%c0_68, %c0_69] : memref<1x256xf32, #tpu.memory_space<vmem>>, vector<1x256xf32>
    %86 = vector.broadcast %85 : vector<1x256xf32> to vector<10x256xf32>
    %87 = arith.mulf %84, %86 : vector<10x256xf32>
    %c0_70 = arith.constant 0 : index
    %c0_71 = arith.constant 0 : index
    %88 = vector.load %arg10[%c0_70, %c0_71] : memref<1x256xf32, #tpu.memory_space<vmem>>, vector<1x256xf32>
    %89 = vector.broadcast %88 : vector<1x256xf32> to vector<10x256xf32>
    %90 = arith.addf %87, %89 : vector<10x256xf32>
    %cst_72 = arith.constant 0.000000e+00 : f32
    %91 = vector.broadcast %cst_72 : f32 to vector<10x256xf32>
    %92 = arith.maximumf %90, %91 : vector<10x256xf32>
    %93 = vector.extract_strided_slice %92 {offsets = [0, 0], sizes = [10, 64], strides = [1, 1]} : vector<10x256xf32> to vector<10x64xf32>
    %94 = vector.extract_strided_slice %92 {offsets = [0, 64], sizes = [10, 64], strides = [1, 1]} : vector<10x256xf32> to vector<10x64xf32>
    %95 = arith.maximumf %93, %94 : vector<10x64xf32>
    %96 = vector.extract_strided_slice %92 {offsets = [0, 128], sizes = [10, 64], strides = [1, 1]} : vector<10x256xf32> to vector<10x64xf32>
    %97 = arith.maximumf %95, %96 : vector<10x64xf32>
    %98 = vector.extract_strided_slice %92 {offsets = [0, 192], sizes = [10, 64], strides = [1, 1]} : vector<10x256xf32> to vector<10x64xf32>
    %99 = arith.maximumf %97, %98 : vector<10x64xf32>
    %100 = vector.extract_strided_slice %99 {offsets = [0, 0], sizes = [4, 64], strides = [1, 1]} : vector<10x64xf32> to vector<4x64xf32>
    %cst_73 = arith.constant dense<0xFF800000> : vector<64xf32>
    %101 = vector.multi_reduction <maximumf>, %100, %cst_73 [0] : vector<4x64xf32> to vector<64xf32>
    %102 = vector.shape_cast %101 : vector<64xf32> to vector<1x64xf32>
    %103 = vector.extract_strided_slice %99 {offsets = [6, 0], sizes = [4, 64], strides = [1, 1]} : vector<10x64xf32> to vector<4x64xf32>
    %cst_74 = arith.constant dense<0xFF800000> : vector<64xf32>
    %104 = vector.multi_reduction <maximumf>, %103, %cst_74 [0] : vector<4x64xf32> to vector<64xf32>
    %105 = vector.shape_cast %104 : vector<64xf32> to vector<1x64xf32>
    %106 = tpu.concatenate %102, %105 in 0 : vector<1x64xf32>, vector<1x64xf32> -> vector<2x64xf32>
    %c0_75 = arith.constant 0 : index
    %c0_76 = arith.constant 0 : index
    %107 = vector.load %arg19[%c0_75, %c0_76] : memref<64x5xf32, #tpu.memory_space<vmem>>, vector<64x5xf32>
    %cst_77 = arith.constant dense<0.000000e+00> : vector<2x5xf32>
    %108 = tpu.matmul %106, %107, %cst_77 {dimension_numbers = #tpu.dot_dimension_numbers<[1], [0], [0], [1], [0, 0, 1, 1], [], []>} : vector<2x64xf32>, vector<64x5xf32>, vector<2x5xf32> -> vector<2x5xf32>
    %c0_78 = arith.constant 0 : index
    %c0_79 = arith.constant 0 : index
    %109 = vector.load %arg20[%c0_78, %c0_79] : memref<1x5xf32, #tpu.memory_space<vmem>>, vector<1x5xf32>
    %110 = vector.broadcast %109 : vector<1x5xf32> to vector<2x5xf32>
    %111 = arith.addf %108, %110 : vector<2x5xf32>
    %c0_80 = arith.constant 0 : index
    %c0_81 = arith.constant 0 : index
    %112 = vector.load %arg21[%c0_80, %c0_81] : memref<2x5xf32, #tpu.memory_space<vmem>>, vector<2x5xf32>
    tpu.vector_store %arg21[%c0_80, %c0_81], %111 {strides = array<i32>} : memref<2x5xf32, #tpu.memory_space<vmem>>, vector<2x5xf32>,
    return
  }
  func.func @transform_0(%arg0: i32) -> (i32, i32) {
    %c0_i32 = arith.constant 0 : i32
    %c0_i32_0 = arith.constant 0 : i32
    return %arg0, %c0_i32 : i32, i32
  }
  func.func @transform_1(%arg0: i32) -> (i32, i32, i32) {
    %c0_i32 = arith.constant 0 : i32
    %c0_i32_0 = arith.constant 0 : i32
    %c0_i32_1 = arith.constant 0 : i32
    %c0_i32_2 = arith.constant 0 : i32
    return %c0_i32, %c0_i32_0, %c0_i32_1 : i32, i32, i32
  }
  func.func @transform_2(%arg0: i32) -> (i32, i32) {
    %c0_i32 = arith.constant 0 : i32
    %c0_i32_0 = arith.constant 0 : i32
    %c0_i32_1 = arith.constant 0 : i32
    return %c0_i32, %c0_i32_0 : i32, i32
  }
  func.func @transform_3(%arg0: i32) -> (i32, i32) {
    %c0_i32 = arith.constant 0 : i32
    %c0_i32_0 = arith.constant 0 : i32
    %c0_i32_1 = arith.constant 0 : i32
    return %c0_i32, %c0_i32_0 : i32, i32
  }
  func.func @transform_4(%arg0: i32) -> (i32, i32, i32) {
    %c0_i32 = arith.constant 0 : i32
    %c0_i32_0 = arith.constant 0 : i32
    %c0_i32_1 = arith.constant 0 : i32
    %c0_i32_2 = arith.constant 0 : i32
    return %c0_i32, %c0_i32_0, %c0_i32_1 : i32, i32, i32
  }
  func.func @transform_5(%arg0: i32) -> (i32, i32) {
    %c0_i32 = arith.constant 0 : i32
    %c0_i32_0 = arith.constant 0 : i32
    %c0_i32_1 = arith.constant 0 : i32
    return %c0_i32, %c0_i32_0 : i32, i32
  }
  func.func @transform_6(%arg0: i32) -> (i32, i32) {
    %c0_i32 = arith.constant 0 : i32
    %c0_i32_0 = arith.constant 0 : i32
    %c0_i32_1 = arith.constant 0 : i32
    return %c0_i32, %c0_i32_0 : i32, i32
  }
  func.func @transform_7(%arg0: i32) -> (i32, i32, i32) {
    %c0_i32 = arith.constant 0 : i32
    %c0_i32_0 = arith.constant 0 : i32
    %c0_i32_1 = arith.constant 0 : i32
    %c0_i32_2 = arith.constant 0 : i32
    return %c0_i32, %c0_i32_0, %c0_i32_1 : i32, i32, i32
  }
  func.func @transform_8(%arg0: i32) -> (i32, i32) {
    %c0_i32 = arith.constant 0 : i32
    %c0_i32_0 = arith.constant 0 : i32
    %c0_i32_1 = arith.constant 0 : i32
    return %c0_i32, %c0_i32_0 : i32, i32
  }
  func.func @transform_9(%arg0: i32) -> (i32, i32) {
    %c0_i32 = arith.constant 0 : i32
    %c0_i32_0 = arith.constant 0 : i32
    %c0_i32_1 = arith.constant 0 : i32
    return %c0_i32, %c0_i32_0 : i32, i32
  }
  func.func @transform_10(%arg0: i32) -> (i32, i32) {
    %c0_i32 = arith.constant 0 : i32
    %c0_i32_0 = arith.constant 0 : i32
    %c0_i32_1 = arith.constant 0 : i32
    return %c0_i32, %c0_i32_0 : i32, i32
  }
  func.func @transform_11(%arg0: i32) -> (i32, i32) {
    %c0_i32 = arith.constant 0 : i32
    %c0_i32_0 = arith.constant 0 : i32
    %c0_i32_1 = arith.constant 0 : i32
    return %c0_i32, %c0_i32_0 : i32, i32
  }
  func.func @transform_12(%arg0: i32) -> (i32, i32) {
    %c0_i32 = arith.constant 0 : i32
    %c0_i32_0 = arith.constant 0 : i32
    %c0_i32_1 = arith.constant 0 : i32
    return %c0_i32, %c0_i32_0 : i32, i32
  }
  func.func @transform_13(%arg0: i32) -> (i32, i32) {
    %c0_i32 = arith.constant 0 : i32
    %c0_i32_0 = arith.constant 0 : i32
    %c0_i32_1 = arith.constant 0 : i32
    return %c0_i32, %c0_i32_0 : i32, i32
  }
  func.func @transform_14(%arg0: i32) -> (i32, i32) {
    %c0_i32 = arith.constant 0 : i32
    %c0_i32_0 = arith.constant 0 : i32
    %c0_i32_1 = arith.constant 0 : i32
    return %c0_i32, %c0_i32_0 : i32, i32
  }
  func.func @transform_15(%arg0: i32) -> (i32, i32) {
    %c0_i32 = arith.constant 0 : i32
    %c0_i32_0 = arith.constant 0 : i32
    %c0_i32_1 = arith.constant 0 : i32
    return %c0_i32, %c0_i32_0 : i32, i32
  }
  func.func @transform_16(%arg0: i32) -> (i32, i32) {
    %c0_i32 = arith.constant 0 : i32
    %c0_i32_0 = arith.constant 0 : i32
    %c0_i32_1 = arith.constant 0 : i32
    return %c0_i32, %c0_i32_0 : i32, i32
  }
  func.func @transform_17(%arg0: i32) -> (i32, i32) {
    %c0_i32 = arith.constant 0 : i32
    %c0_i32_0 = arith.constant 0 : i32
    %c0_i32_1 = arith.constant 0 : i32
    return %c0_i32, %c0_i32_0 : i32, i32
  }
  func.func @transform_18(%arg0: i32) -> (i32, i32) {
    %c0_i32 = arith.constant 0 : i32
    %c0_i32_0 = arith.constant 0 : i32
    %c0_i32_1 = arith.constant 0 : i32
    return %c0_i32, %c0_i32_0 : i32, i32
  }
  func.func @transform_19(%arg0: i32) -> (i32, i32) {
    %c0_i32 = arith.constant 0 : i32
    %c0_i32_0 = arith.constant 0 : i32
    %c0_i32_1 = arith.constant 0 : i32
    return %c0_i32, %c0_i32_0 : i32, i32
  }
  func.func @transform_20(%arg0: i32) -> (i32, i32) {
    %c0_i32 = arith.constant 0 : i32
    %c0_i32_0 = arith.constant 0 : i32
    return %arg0, %c0_i32 : i32, i32
  }
}

</mosaic_0001>

<llo_original>
// kernel: tile.33
$region0: #{tile.33}
  #allocation0 [shape = 's32[1]{0}', space=sflag, size = 0x4, scoped, tag = 'scoped memory for tile.33']
  %s0 = inlined_call_operand.vmem [shape: f32[16], index: 0, kind: input, shape index: {}]
  %s1 = inlined_call_operand.vmem [shape: f32[16,16], index: 1, kind: output, shape index: {}]
  // Predicated region
  $region2: #{tile.33} parent=0 // pred_check
    _
  $region3: #{tile.33} parent=0 // pred_check_branch
    %3 = sbr.rel (0) target = $region5
  $region4: #{tile.33} parent=0 // pred_region
    _
  $region5: #{tile.33} parent=0 // pred_fallthru
    _
  %v4 = vld [vmem:[%s0] ss:$0 sm:$0xff]
  %5 = vst [vmem:[%s1] sm:$0xff] %v4
  %s6 = scalar_lea.vmem %s1, 8
  %7 = vst [vmem:[%s6] sm:$0xff] %v4

// kernel: tile.34
$region0: #{tile.34}
  %s0 = inlined_call_operand.vmem [shape: f32[16,16], index: 0, kind: input, shape index: {}]
  %s1 = inlined_call_operand.vmem [shape: f32[1,256], index: 1, kind: output, shape index: {}]
  $region1: #{tile.34} parent=0
    #allocation0 [shape = 'u8[8192]{0}', space=vmem, size = 0x2000, scoped, tag = 'scoped mem for output reshape']
    %s2 = smov 3
    %v3 = vld [vmem:[%s0] ss:$8 sm:%s2]
    %vm4 = vcmask 130048
    %5 = vst.msk [vmem:[#allocation0] ss:$8 sm:$0x3] %vm4, %v3
    %s6 = scalar_lea.vmem %s0, 7
    %s7 = smov 3
    %v8 = vld [vmem:[%s6] ss:$8 sm:%s7]
    %9 = vrot.lane.b32.xlu0 %v8, 112
    %v10 = vpop.permute.xlu0 %9
    %vm11 = vcmask 1048448
    %12 = vst.msk [vmem:[#allocation0] ss:$8 sm:$0x3] %vm11, %v10
    %s13 = scalar_lea.vmem %s0, 6
    %s14 = smov 3
    %v15 = vld [vmem:[%s13] ss:$8 sm:%s14]
    %16 = vrot.lane.b32.xlu0 %v15, 96
    %v17 = vpop.permute.xlu0 %16
    %vm18 = vcmask 917248
    %19 = vst.msk [vmem:[#allocation0] ss:$8 sm:$0x3] %vm18, %v17
    %s20 = scalar_lea.vmem %s0, 5
    %s21 = smov 3
    %v22 = vld [vmem:[%s20] ss:$8 sm:%s21]
    %23 = vrot.lane.b32.xlu0 %v22, 80
    %v24 = vpop.permute.xlu0 %23
    %vm25 = vcmask 786048
    %26 = vst.msk [vmem:[#allocation0] ss:$8 sm:$0x3] %vm25, %v24
    %s27 = scalar_lea.vmem %s0, 4
    %s28 = smov 3
    %v29 = vld [vmem:[%s27] ss:$8 sm:%s28]
    %30 = vrot.lane.b32.xlu0 %v29, 64
    %v31 = vpop.permute.xlu0 %30
    %vm32 = vcmask 654848
    %33 = vst.msk [vmem:[#allocation0] ss:$8 sm:$0x3] %vm32, %v31
    %s34 = scalar_lea.vmem %s0, 3
    %s35 = smov 3
    %v36 = vld [vmem:[%s34] ss:$8 sm:%s35]
    %37 = vrot.lane.b32.xlu0 %v36, 48
    %v38 = vpop.permute.xlu0 %37
    %vm39 = vcmask 523648
    %40 = vst.msk [vmem:[#allocation0] ss:$8 sm:$0x3] %vm39, %v38
    %s41 = scalar_lea.vmem %s0, 2
    %s42 = smov 3
    %v43 = vld [vmem:[%s41] ss:$8 sm:%s42]
    %44 = vrot.lane.b32.xlu0 %v43, 32
    %v45 = vpop.permute.xlu0 %44
    %vm46 = vcmask 392448
    %47 = vst.msk [vmem:[#allocation0] ss:$8 sm:$0x3] %vm46, %v45
    %s48 = scalar_lea.vmem %s0, 1
    %s49 = smov 3
    %v50 = vld [vmem:[%s48] ss:$8 sm:%s49]
    %51 = vrot.lane.b32.xlu0 %v50, 16
    %v52 = vpop.permute.xlu0 %51
    %vm53 = vcmask 261248
    %54 = vst.msk [vmem:[#allocation0] ss:$8 sm:$0x3] %vm53, %v52
    %s56 = ssub.s32 2, 1
    %v57 = vld [vmem:[#allocation0] sm:%s56]
    %s59 = ssub.s32 2, 1
    %60 = vst [vmem:[%s1] sm:%s59] %v57
    %s61 = scalar_lea.vmem [#allocation0], 8
    %v62 = vld [vmem:[%s61] sm:%s56]
    %s64 = ssub.s32 2, 1
    %s65 = scalar_lea.vmem %s1, 1
    %66 = vst [vmem:[%s65] sm:%s64] %v62

// kernel: tile.43
$region0: #{tile.43}
  #allocation0 [shape = 's32[1]{0}', space=sflag, size = 0x4, scoped, tag = 'scoped memory for tile.43']
  %s0 = inlined_call_operand.vmem [shape: f32[32], index: 0, kind: input, shape index: {}]
  %s1 = inlined_call_operand.vmem [shape: f32[8,32], index: 1, kind: output, shape index: {}]
  // Predicated region
  $region2: #{tile.43} parent=0 // pred_check
    _
  $region3: #{tile.43} parent=0 // pred_check_branch
    %3 = sbr.rel (0) target = $region5
  $region4: #{tile.43} parent=0 // pred_region
    _
  $region5: #{tile.43} parent=0 // pred_fallthru
    _
  %v4 = vld [vmem:[%s0] ss:$0 sm:$0xff]
  %5 = vst [vmem:[%s1] sm:$0xff] %v4

// kernel: tile.44
$region0: #{tile.44}
  %s0 = inlined_call_operand.vmem [shape: f32[8,32], index: 0, kind: input, shape index: {}]
  %s1 = inlined_call_operand.vmem [shape: f32[1,256], index: 1, kind: output, shape index: {}]
  $region1: #{tile.44} parent=0
    #allocation0 [shape = 'u8[8192]{0}', space=vmem, size = 0x2000, scoped, tag = 'scoped mem for output reshape']
    %s2 = smov 3
    %v3 = vld [vmem:[%s0] ss:$4 sm:%s2]
    %vm4 = vcmask 261120
    %5 = vst.msk [vmem:[#allocation0] ss:$8 sm:$0x3] %vm4, %v3
    %s6 = scalar_lea.vmem %s0, 3
    %s7 = smov 3
    %v8 = vld [vmem:[%s6] ss:$4 sm:%s7]
    %9 = vrot.lane.b32.xlu0 %v8, 96
    %v10 = vpop.permute.xlu0 %9
    %vm11 = vcmask 1048320
    %12 = vst.msk [vmem:[#allocation0] ss:$8 sm:$0x3] %vm11, %v10
    %s13 = scalar_lea.vmem %s0, 2
    %s14 = smov 3
    %v15 = vld [vmem:[%s13] ss:$4 sm:%s14]
    %16 = vrot.lane.b32.xlu0 %v15, 64
    %v17 = vpop.permute.xlu0 %16
    %vm18 = vcmask 785920
    %19 = vst.msk [vmem:[#allocation0] ss:$8 sm:$0x3] %vm18, %v17
    %s20 = scalar_lea.vmem %s0, 1
    %s21 = smov 3
    %v22 = vld [vmem:[%s20] ss:$4 sm:%s21]
    %23 = vrot.lane.b32.xlu0 %v22, 32
    %v24 = vpop.permute.xlu0 %23
    %vm25 = vcmask 523520
    %26 = vst.msk [vmem:[#allocation0] ss:$8 sm:$0x3] %vm25, %v24
    %s28 = ssub.s32 2, 1
    %v29 = vld [vmem:[#allocation0] sm:%s28]
    %s31 = ssub.s32 2, 1
    %32 = vst [vmem:[%s1] sm:%s31] %v29
    %s33 = scalar_lea.vmem [#allocation0], 8
    %v34 = vld [vmem:[%s33] sm:%s28]
    %s36 = ssub.s32 2, 1
    %s37 = scalar_lea.vmem %s1, 1
    %38 = vst [vmem:[%s37] sm:%s36] %v34

// kernel: tile.53
$region0: #{tile.53}
  #allocation0 [shape = 's32[1]{0}', space=sflag, size = 0x4, scoped, tag = 'scoped memory for tile.53']
  %s0 = inlined_call_operand.vmem [shape: f32[64], index: 0, kind: input, shape index: {}]
  %s1 = inlined_call_operand.vmem [shape: f32[4,64], index: 1, kind: output, shape index: {}]
  // Predicated region
  $region2: #{tile.53} parent=0 // pred_check
    _
  $region3: #{tile.53} parent=0 // pred_check_branch
    %3 = sbr.rel (0) target = $region5
  $region4: #{tile.53} parent=0 // pred_region
    _
  $region5: #{tile.53} parent=0 // pred_fallthru
    _
  %v4 = vld [vmem:[%s0] ss:$0 sm:$0xff]
  %5 = vst [vmem:[%s1] sm:$0xf] %v4

// kernel: tile.54
$region0: #{tile.54}
  %s0 = inlined_call_operand.vmem [shape: f32[4,64], index: 0, kind: input, shape index: {}]
  %s1 = inlined_call_operand.vmem [shape: f32[1,256], index: 1, kind: output, shape index: {}]
  $region1: #{tile.54} parent=0
    #allocation0 [shape = 'u8[8192]{0}', space=vmem, size = 0x2000, scoped, tag = 'scoped mem for output reshape']
    #allocation1 [shape = 'u8[4096]{0}', space=vmem, size = 0x1000, scoped, tag = 'scoped mem for input reshape']
    %s3 = ssub.s32 16, 1
    %v4 = vld [vmem:[%s0] sm:%s3]
    %5 = vst [vmem:[#allocation1] sm:%s3] %v4
    %s6 = smov 3
    %v7 = vld [vmem:[#allocation1] ss:$2 sm:%s6]
    %vm8 = vcmask 523264
    %9 = vst.msk [vmem:[#allocation0] ss:$8 sm:$0x3] %vm8, %v7
    %s10 = scalar_lea.vmem [#allocation1], 1
    %s11 = smov 3
    %v12 = vld [vmem:[%s10] ss:$2 sm:%s11]
    %13 = vrot.lane.b32.xlu0 %v12, 64
    %v14 = vpop.permute.xlu0 %13
    %vm15 = vcmask 1048064
    %16 = vst.msk [vmem:[#allocation0] ss:$8 sm:$0x3] %vm15, %v14
    %s18 = ssub.s32 2, 1
    %v19 = vld [vmem:[#allocation0] sm:%s18]
    %s21 = ssub.s32 2, 1
    %22 = vst [vmem:[%s1] sm:%s21] %v19
    %s23 = scalar_lea.vmem [#allocation0], 8
    %v24 = vld [vmem:[%s23] sm:%s18]
    %s26 = ssub.s32 2, 1
    %s27 = scalar_lea.vmem %s1, 1
    %28 = vst [vmem:[%s27] sm:%s26] %v24

// kernel: accent_cnn_forward.1
$region0: #{accent_cnn_forward.1}
  #allocation0 [shape = 'u32[]', space=smem, size = 0x4, offset = 0x4, fixed_abs, tag = 'smem constant byte address 0x4 - core index']
  #allocation1 [shape = 'u32[72,128]{1,0:T(1,128)}', space=vmem, size = 0x9000, scoped, tag = 'internal scratch']
  %s0 = inlined_call_operand.vmem [shape: bf16[36,16], index: 0, kind: input, shape index: {}]
  %s1 = inlined_call_operand.vmem [shape: bf16[3,16,256], index: 1, kind: input, shape index: {}]
  %s2 = inlined_call_operand.vmem [shape: f32[1,256], index: 2, kind: input, shape index: {}]
  %s3 = inlined_call_operand.vmem [shape: f32[1,256], index: 3, kind: input, shape index: {}]
  %s4 = inlined_call_operand.vmem [shape: bf16[3,128,256], index: 4, kind: input, shape index: {}]
  %s5 = inlined_call_operand.vmem [shape: f32[1,256], index: 5, kind: input, shape index: {}]
  %s6 = inlined_call_operand.vmem [shape: f32[1,256], index: 6, kind: input, shape index: {}]
  %s7 = inlined_call_operand.vmem [shape: bf16[3,128,256], index: 7, kind: input, shape index: {}]
  %s8 = inlined_call_operand.vmem [shape: f32[1,256], index: 8, kind: input, shape index: {}]
  %s9 = inlined_call_operand.vmem [shape: f32[1,256], index: 9, kind: input, shape index: {}]
  %s10 = inlined_call_operand.vmem [shape: bf16[20,34], index: 10, kind: input, shape index: {}]
  %s11 = inlined_call_operand.vmem [shape: bf16[20,34], index: 11, kind: input, shape index: {}]
  %s12 = inlined_call_operand.vmem [shape: bf16[256,128], index: 12, kind: input, shape index: {}]
  %s13 = inlined_call_operand.vmem [shape: bf16[256,128], index: 13, kind: input, shape index: {}]
  %s14 = inlined_call_operand.vmem [shape: bf16[12,18], index: 14, kind: input, shape index: {}]
  %s15 = inlined_call_operand.vmem [shape: bf16[12,18], index: 15, kind: input, shape index: {}]
  %s16 = inlined_call_operand.vmem [shape: bf16[256,128], index: 16, kind: input, shape index: {}]
  %s17 = inlined_call_operand.vmem [shape: bf16[256,128], index: 17, kind: input, shape index: {}]
  %s18 = inlined_call_operand.vmem [shape: f32[64,5], index: 18, kind: input, shape index: {}]
  %s19 = inlined_call_operand.vmem [shape: f32[1,5], index: 19, kind: input, shape index: {}]
  %s20 = inlined_call_operand.hbm [shape: f32[2,5], index: 20, kind: output, shape index: {}]
  %s21 = sld [smem:[#allocation0]]
  $region90: #{accent_cnn_forward.1} parent=0
    _
  %s23 = ssub.s32 1, %s21
  %s24 = scalar_select 0, %s23, %s21
  $region1: #{accent_cnn_forward.1} parent=0
    #allocation2 [shape = 'u8[1024]{0}', space=vmem, size = 0x400, scoped, tag = 'output window, operand 0, single buffered']
    #allocation3 [shape = 's32[1]{0}', space=sflag, size = 0x4, scoped, tag = 'scoped memory for accent_cnn_forward.1']
    %25 = vsyncpa [#allocation3], 0
    // Predicated region
    $region2: #{accent_cnn_forward.1} parent=1 // pred_check
      _
    $region3: #{accent_cnn_forward.1} parent=1 // pred_check_branch
      %27 = sbr.rel (0) target = $region5
    $region4: #{accent_cnn_forward.1} parent=1 // pred_region
      _
    $region5: #{accent_cnn_forward.1} parent=1 // pred_fallthru
      _
    // Predicated region
    $region6: #{accent_cnn_forward.1} parent=1 // pred_check
      _
    $region7: #{accent_cnn_forward.1} parent=1 // pred_check_branch
      %29 = sbr.rel (0) target = $region9
    $region8: #{accent_cnn_forward.1} parent=1 // pred_region
      _
    $region9: #{accent_cnn_forward.1} parent=1 // pred_fallthru
      _
    // Predicated region
    $region10: #{accent_cnn_forward.1} parent=1 // pred_check
      _
    $region11: #{accent_cnn_forward.1} parent=1 // pred_check_branch
      %31 = sbr.rel (0) target = $region13
    $region12: #{accent_cnn_forward.1} parent=1 // pred_region
      _
    $region13: #{accent_cnn_forward.1} parent=1 // pred_fallthru
      _
    // Predicated region
    $region14: #{accent_cnn_forward.1} parent=1 // pred_check
      _
    $region15: #{accent_cnn_forward.1} parent=1 // pred_check_branch
      %33 = sbr.rel (0) target = $region17
    $region16: #{accent_cnn_forward.1} parent=1 // pred_region
      _
    $region17: #{accent_cnn_forward.1} parent=1 // pred_fallthru
      _
    // Predicated region
    $region18: #{accent_cnn_forward.1} parent=1 // pred_check
      _
    $region19: #{accent_cnn_forward.1} parent=1 // pred_check_branch
      %35 = sbr.rel (0) target = $region21
    $region20: #{accent_cnn_forward.1} parent=1 // pred_region
      _
    $region21: #{accent_cnn_forward.1} parent=1 // pred_fallthru
      _
    // Predicated region
    $region22: #{accent_cnn_forward.1} parent=1 // pred_check
      _
    $region23: #{accent_cnn_forward.1} parent=1 // pred_check_branch
      %37 = sbr.rel (0) target = $region25
    $region24: #{accent_cnn_forward.1} parent=1 // pred_region
      _
    $region25: #{accent_cnn_forward.1} parent=1 // pred_fallthru
      _
    // Predicated region
    $region26: #{accent_cnn_forward.1} parent=1 // pred_check
      _
    $region27: #{accent_cnn_forward.1} parent=1 // pred_check_branch
      %39 = sbr.rel (0) target = $region29
    $region28: #{accent_cnn_forward.1} parent=1 // pred_region
      _
    $region29: #{accent_cnn_forward.1} parent=1 // pred_fallthru
      _
    // Predicated region
    $region30: #{accent_cnn_forward.1} parent=1 // pred_check
      _
    $region31: #{accent_cnn_forward.1} parent=1 // pred_check_branch
      %41 = sbr.rel (0) target = $region33
    $region32: #{accent_cnn_forward.1} parent=1 // pred_region
      _
    $region33: #{accent_cnn_forward.1} parent=1 // pred_fallthru
      _
    // Predicated region
    $region34: #{accent_cnn_forward.1} parent=1 // pred_check
      _
    $region35: #{accent_cnn_forward.1} parent=1 // pred_check_branch
      %43 = sbr.rel (0) target = $region37
    $region36: #{accent_cnn_forward.1} parent=1 // pred_region
      _
    $region37: #{accent_cnn_forward.1} parent=1 // pred_fallthru
      _
    // Predicated region
    $region38: #{accent_cnn_forward.1} parent=1 // pred_check
      _
    $region39: #{accent_cnn_forward.1} parent=1 // pred_check_branch
      %45 = sbr.rel (0) target = $region41
    $region40: #{accent_cnn_forward.1} parent=1 // pred_region
      _
    $region41: #{accent_cnn_forward.1} parent=1 // pred_fallthru
      _
    // Predicated region
    $region42: #{accent_cnn_forward.1} parent=1 // pred_check
      _
    $region43: #{accent_cnn_forward.1} parent=1 // pred_check_branch
      %47 = sbr.rel (0) target = $region45
    $region44: #{accent_cnn_forward.1} parent=1 // pred_region
      _
    $region45: #{accent_cnn_forward.1} parent=1 // pred_fallthru
      _
    // Predicated region
    $region46: #{accent_cnn_forward.1} parent=1 // pred_check
      _
    $region47: #{accent_cnn_forward.1} parent=1 // pred_check_branch
      %49 = sbr.rel (0) target = $region49
    $region48: #{accent_cnn_forward.1} parent=1 // pred_region
      _
    $region49: #{accent_cnn_forward.1} parent=1 // pred_fallthru
      _
    // Predicated region
    $region50: #{accent_cnn_forward.1} parent=1 // pred_check
      _
    $region51: #{accent_cnn_forward.1} parent=1 // pred_check_branch
      %51 = sbr.rel (0) target = $region53
    $region52: #{accent_cnn_forward.1} parent=1 // pred_region
      _
    $region53: #{accent_cnn_forward.1} parent=1 // pred_fallthru
      _
    // Predicated region
    $region54: #{accent_cnn_forward.1} parent=1 // pred_check
      _
    $region55: #{accent_cnn_forward.1} parent=1 // pred_check_branch
      %53 = sbr.rel (0) target = $region57
    $region56: #{accent_cnn_forward.1} parent=1 // pred_region
      _
    $region57: #{accent_cnn_forward.1} parent=1 // pred_fallthru
      _
    // Predicated region
    $region58: #{accent_cnn_forward.1} parent=1 // pred_check
      _
    $region59: #{accent_cnn_forward.1} parent=1 // pred_check_branch
      %55 = sbr.rel (0) target = $region61
    $region60: #{accent_cnn_forward.1} parent=1 // pred_region
      _
    $region61: #{accent_cnn_forward.1} parent=1 // pred_fallthru
      _
    // Predicated region
    $region62: #{accent_cnn_forward.1} parent=1 // pred_check
      _
    $region63: #{accent_cnn_forward.1} parent=1 // pred_check_branch
      %57 = sbr.rel (0) target = $region65
    $region64: #{accent_cnn_forward.1} parent=1 // pred_region
      _
    $region65: #{accent_cnn_forward.1} parent=1 // pred_fallthru
      _
    // Predicated region
    $region66: #{accent_cnn_forward.1} parent=1 // pred_check
      _
    $region67: #{accent_cnn_forward.1} parent=1 // pred_check_branch
      %59 = sbr.rel (0) target = $region69
    $region68: #{accent_cnn_forward.1} parent=1 // pred_region
      _
    $region69: #{accent_cnn_forward.1} parent=1 // pred_fallthru
      _
    // Predicated region
    $region70: #{accent_cnn_forward.1} parent=1 // pred_check
      _
    $region71: #{accent_cnn_forward.1} parent=1 // pred_check_branch
      %61 = sbr.rel (0) target = $region73
    $region72: #{accent_cnn_forward.1} parent=1 // pred_region
      _
    $region73: #{accent_cnn_forward.1} parent=1 // pred_fallthru
      _
    // Predicated region
    $region74: #{accent_cnn_forward.1} parent=1 // pred_check
      _
    $region75: #{accent_cnn_forward.1} parent=1 // pred_check_branch
      %63 = sbr.rel (0) target = $region77
    $region76: #{accent_cnn_forward.1} parent=1 // pred_region
      _
    $region77: #{accent_cnn_forward.1} parent=1 // pred_fallthru
      _
    // Predicated region
    $region78: #{accent_cnn_forward.1} parent=1 // pred_check
      _
    $region79: #{accent_cnn_forward.1} parent=1 // pred_check_branch
      %65 = sbr.rel (0) target = $region81
    $region80: #{accent_cnn_forward.1} parent=1 // pred_region
      _
    $region81: #{accent_cnn_forward.1} parent=1 // pred_fallthru
      _
    %v67 = vld [vmem:[%s0] sm:$0xf]
    %v68 = vld [vmem:[%s0 + $0x4] sm:$0xf]
    %v69 = vld [vmem:[%s0 + $0x8] sm:$0xf]
    %v70 = vld [vmem:[%s0 + $0xc] sm:$0xf]
    %v71 = vld [vmem:[%s0 + $0x10] sm:$0x3]
    %v72 = vld [vmem:[%s1] sm:$0xff]
    %v73 = vld [vmem:[%s1 + $0x8] sm:$0xff]
    %s74 = scalar_lea.vmem %s1, 16
    %v75 = vld [vmem:[%s74] sm:$0xff]
    %v76 = vld [vmem:[%s74 + $0x8] sm:$0xff]
    %v82 = vunpack.c.l.b16 %v67
    %v83 = vunpack.c.l.b16 %v68
    %v84 = vunpack.c.l.b16 %v69
    %v85 = vunpack.c.l.b16 %v70
    %v86 = vunpack.c.l.b16 %v71
    %v87 = vpack.c.b16 %v83, %v82
    %v88 = vpack.c.b16 %v85, %v84
    %v89 = vpack.c.b16 %v86, %v86
    %vm90 = vsmask.f32 7424
    %v92 = vshrl.u32 %v87, 16
    %v94 = vshll.u32 %v87, 16
    %v96 = vrot.slane %v94, 1
    %v97 = vor.u32 %v92, %v96
    %v99 = vshll.u32 %v88, 16
    %v101 = vrot.slane %v99, 1
    %v102 = vsel %vm90, %v97, %v101
    %v103 = vshrl.u32 %v88, 16
    %v105 = vor.u32 %v103, %v101
    %v107 = vshll.u32 %v89, 16
    %v109 = vrot.slane %v107, 1
    %v110 = vsel %vm90, %v105, %v109
    %v111 = vshrl.u32 %v89, 16
    %v113 = vor.u32 %v111, %v109
    %v116 = vunpack.c.l.b16 %v75
    %v117 = vunpack.c.h.b16 %v75
    %v118 = vunpack.c.l.b16 %v76
    %v119 = vunpack.c.h.b16 %v76
    %v120 = vpack.c.b16 %v118, %v116
    %v121 = vpack.c.b16 %v119, %v117
    %vm124 = vcmask 130048
    %v126 = vsel %vm124, %v102, 0
    %v129 = vsel %vm124, %v110, 0
    %v132 = vsel %vm124, %v113, 0
    %134 = vmatpush.bf16.msra.mxu0 0
    %135 = vmatpush.bf16.msra.mxu0 0
    %136 = vmatpush.bf16.msra.mxu0 0
    %137 = vmatpush.bf16.msra.mxu0 0
    %138 = vmatpush.bf16.msra.mxu0 0
    %139 = vmatpush.bf16.msra.mxu0 0
    %140 = vmatpush.bf16.msra.mxu0 0
    %141 = vmatpush.bf16.msra.mxu0 %v120
    %142 = vmatmul.bf16.gmra.mxu0 %v126
    %v143 = vpop.f32.mrf.mxu0
    %v144 = vadd.f32 0.0, %v143
    %v145 = vpop.f32.mrf.mxu0
    %v146 = vadd.f32 0.0, %v145
    %147 = vmatmul.bf16.gmra.mxu0 %v129
    %v148 = vpop.f32.mrf.mxu0
    %v149 = vadd.f32 0.0, %v148
    %v150 = vpop.f32.mrf.mxu0
    %v151 = vadd.f32 0.0, %v150
    %152 = vmatmul.bf16.gmra.mxu0 %v132
    %v153 = vpop.f32.mrf.mxu0
    %v154 = vadd.f32 0.0, %v153
    %v155 = vpop.f32.mrf.mxu0
    %156 = vdwg.mxu0
    %157 = vmatpush.bf16.msra.mxu0 0
    %158 = vmatpush.bf16.msra.mxu0 0
    %159 = vmatpush.bf16.msra.mxu0 0
    %160 = vmatpush.bf16.msra.mxu0 0
    %161 = vmatpush.bf16.msra.mxu0 0
    %162 = vmatpush.bf16.msra.mxu0 0
    %163 = vmatpush.bf16.msra.mxu0 0
    %164 = vmatpush.bf16.msra.mxu0 %v121
    %165 = vmatmul.bf16.gmra.mxu0 %v126
    %v166 = vpop.f32.mrf.mxu0
    %v167 = vadd.f32 0.0, %v166
    %v168 = vpop.f32.mrf.mxu0
    %v169 = vadd.f32 0.0, %v168
    %170 = vmatmul.bf16.gmra.mxu0 %v129
    %v171 = vpop.f32.mrf.mxu0
    %v172 = vadd.f32 0.0, %v171
    %v173 = vpop.f32.mrf.mxu0
    %v174 = vadd.f32 0.0, %v173
    %175 = vmatmul.bf16.gmra.mxu0 %v132
    %v176 = vpop.f32.mrf.mxu0
    %v177 = vadd.f32 0.0, %v176
    %v178 = vpop.f32.mrf.mxu0
    %179 = vdwg.mxu0
    %v182 = vunpack.c.l.b16 %v72
    %v183 = vunpack.c.h.b16 %v72
    %v184 = vunpack.c.l.b16 %v73
    %v185 = vunpack.c.h.b16 %v73
    %v186 = vpack.c.b16 %v184, %v182
    %v187 = vpack.c.b16 %v185, %v183
    %v190 = vsel %vm124, %v87, 0
    %v192 = vsel %vm124, %v88, 0
    %v194 = vsel %vm124, %v89, 0
    %196 = vmatpush.bf16.msra.mxu0 0
    %197 = vmatpush.bf16.msra.mxu0 0
    %198 = vmatpush.bf16.msra.mxu0 0
    %199 = vmatpush.bf16.msra.mxu0 0
    %200 = vmatpush.bf16.msra.mxu0 0
    %201 = vmatpush.bf16.msra.mxu0 0
    %202 = vmatpush.bf16.msra.mxu0 0
    %203 = vmatpush.bf16.msra.mxu0 %v186
    %204 = vmatmul.bf16.gmra.mxu0 %v190
    %v205 = vpop.f32.mrf.mxu0
    %v206 = vadd.f32 %v144, %v205
    %v207 = vpop.f32.mrf.mxu0
    %v208 = vadd.f32 %v146, %v207
    %209 = vmatmul.bf16.gmra.mxu0 %v192
    %v210 = vpop.f32.mrf.mxu0
    %v211 = vadd.f32 %v149, %v210
    %v212 = vpop.f32.mrf.mxu0
    %v213 = vadd.f32 %v151, %v212
    %214 = vmatmul.bf16.gmra.mxu0 %v194
    %v215 = vpop.f32.mrf.mxu0
    %v216 = vadd.f32 %v154, %v215
    %v217 = vpop.f32.mrf.mxu0
    %218 = vdwg.mxu0
    %219 = vmatpush.bf16.msra.mxu0 0
    %220 = vmatpush.bf16.msra.mxu0 0
    %221 = vmatpush.bf16.msra.mxu0 0
    %222 = vmatpush.bf16.msra.mxu0 0
    %223 = vmatpush.bf16.msra.mxu0 0
    %224 = vmatpush.bf16.msra.mxu0 0
    %225 = vmatpush.bf16.msra.mxu0 0
    %226 = vmatpush.bf16.msra.mxu0 %v187
    %227 = vmatmul.bf16.gmra.mxu0 %v190
    %v228 = vpop.f32.mrf.mxu0
    %v229 = vadd.f32 %v167, %v228
    %v230 = vpop.f32.mrf.mxu0
    %v231 = vadd.f32 %v169, %v230
    %232 = vmatmul.bf16.gmra.mxu0 %v192
    %v233 = vpop.f32.mrf.mxu0
    %v234 = vadd.f32 %v172, %v233
    %v235 = vpop.f32.mrf.mxu0
    %v236 = vadd.f32 %v174, %v235
    %237 = vmatmul.bf16.gmra.mxu0 %v194
    %v238 = vpop.f32.mrf.mxu0
    %v239 = vadd.f32 %v177, %v238
    %v240 = vpop.f32.mrf.mxu0
    %241 = vdwg.mxu0
    %s242 = scalar_lea.vmem %s1, 32
    %v243 = vld [vmem:[%s242] sm:$0xff]
    %v244 = vld [vmem:[%s242 + $0x8] sm:$0xff]
    %vm245 = vcmask 1046528
    %v246 = vrot.slane %v87, 1
    %v247 = vrot.slane %v88, 1
    %v248 = vsel %vm245, %v246, %v247
    %v249 = vrot.slane %v89, 1
    %v250 = vsel %vm245, %v247, %v249
    %v253 = vunpack.c.l.b16 %v243
    %v254 = vunpack.c.h.b16 %v243
    %v255 = vunpack.c.l.b16 %v244
    %v256 = vunpack.c.h.b16 %v244
    %v257 = vpack.c.b16 %v255, %v253
    %v258 = vpack.c.b16 %v256, %v254
    %v262 = vsel %vm124, %v248, 0
    %v265 = vsel %vm124, %v250, 0
    %v268 = vsel %vm124, %v249, 0
    %270 = vmatpush.bf16.msra.mxu0 0
    %271 = vmatpush.bf16.msra.mxu0 0
    %272 = vmatpush.bf16.msra.mxu0 0
    %273 = vmatpush.bf16.msra.mxu0 0
    %274 = vmatpush.bf16.msra.mxu0 0
    %275 = vmatpush.bf16.msra.mxu0 0
    %276 = vmatpush.bf16.msra.mxu0 0
    %277 = vmatpush.bf16.msra.mxu0 %v257
    %278 = vmatmul.bf16.gmra.mxu0 %v262
    %v279 = vpop.f32.mrf.mxu0
    %v280 = vadd.f32 0.0, %v279
    %v281 = vpop.f32.mrf.mxu0
    %v282 = vadd.f32 0.0, %v281
    %283 = vmatmul.bf16.gmra.mxu0 %v265
    %v284 = vpop.f32.mrf.mxu0
    %v285 = vadd.f32 0.0, %v284
    %v286 = vpop.f32.mrf.mxu0
    %v287 = vadd.f32 0.0, %v286
    %288 = vmatmul.bf16.gmra.mxu0 %v268
    %v289 = vpop.f32.mrf.mxu0
    %v290 = vadd.f32 0.0, %v289
    %v291 = vpop.f32.mrf.mxu0
    %292 = vdwg.mxu0
    %293 = vmatpush.bf16.msra.mxu0 0
    %294 = vmatpush.bf16.msra.mxu0 0
    %295 = vmatpush.bf16.msra.mxu0 0
    %296 = vmatpush.bf16.msra.mxu0 0
    %297 = vmatpush.bf16.msra.mxu0 0
    %298 = vmatpush.bf16.msra.mxu0 0
    %299 = vmatpush.bf16.msra.mxu0 0
    %300 = vmatpush.bf16.msra.mxu0 %v258
    %301 = vmatmul.bf16.gmra.mxu0 %v262
    %v302 = vpop.f32.mrf.mxu0
    %v303 = vadd.f32 0.0, %v302
    %v304 = vpop.f32.mrf.mxu0
    %v305 = vadd.f32 0.0, %v304
    %306 = vmatmul.bf16.gmra.mxu0 %v265
    %v307 = vpop.f32.mrf.mxu0
    %v308 = vadd.f32 0.0, %v307
    %v309 = vpop.f32.mrf.mxu0
    %v310 = vadd.f32 0.0, %v309
    %311 = vmatmul.bf16.gmra.mxu0 %v268
    %v312 = vpop.f32.mrf.mxu0
    %v313 = vadd.f32 0.0, %v312
    %v314 = vpop.f32.mrf.mxu0
    %315 = vdwg.mxu0
    %v316 = vadd.f32 %v206, %v280
    %v317 = vadd.f32 %v229, %v303
    %v318 = vadd.f32 %v208, %v282
    %v319 = vadd.f32 %v231, %v305
    %v320 = vadd.f32 %v211, %v285
    %v321 = vadd.f32 %v234, %v308
    %v322 = vadd.f32 %v213, %v287
    %v323 = vadd.f32 %v236, %v310
    %v324 = vadd.f32 %v216, %v290
    %v325 = vadd.f32 %v239, %v313
    %v326 = vld [vmem:[%s2] sm:$0x3]
    %v328 = vperm.slane %v326, 0
    %v329 = vperm.slane %v326, 1
    %v332 = vmul.f32 %v316, %v328
    %v333 = vmul.f32 %v317, %v329
    %v334 = vmul.f32 %v318, %v328
    %v335 = vmul.f32 %v319, %v329
    %v336 = vmul.f32 %v320, %v328
    %v337 = vmul.f32 %v321, %v329
    %v338 = vmul.f32 %v322, %v328
    %v339 = vmul.f32 %v323, %v329
    %v340 = vmul.f32 %v324, %v328
    %v341 = vmul.f32 %v325, %v329
    %v342 = vld [vmem:[%s3] sm:$0x3]
    %v344 = vperm.slane %v342, 0
    %v345 = vperm.slane %v342, 1
    %v348 = vadd.f32 %v332, %v344
    %v349 = vadd.f32 %v333, %v345
    %v350 = vadd.f32 %v334, %v344
    %v351 = vadd.f32 %v335, %v345
    %v352 = vadd.f32 %v336, %v344
    %v353 = vadd.f32 %v337, %v345
    %v354 = vadd.f32 %v338, %v344
    %v355 = vadd.f32 %v339, %v345
    %v356 = vadd.f32 %v340, %v344
    %v357 = vadd.f32 %v341, %v345
    %v358 = vmax.f32 %v348, 0.0
    %v359 = vmax.f32 %v349, 0.0
    %v360 = vmax.f32 %v350, 0.0
    %v361 = vmax.f32 %v351, 0.0
    %v362 = vmax.f32 %v352, 0.0
    %v363 = vmax.f32 %v353, 0.0
    %v364 = vmax.f32 %v354, 0.0
    %v365 = vmax.f32 %v355, 0.0
    %v366 = vmax.f32 %v356, 0.0
    %v367 = vmax.f32 %v357, 0.0
    %v368 = vpack.c.bf16 %v360, %v358
    %v369 = vpack.c.bf16 %v361, %v359
    %v370 = vpack.c.bf16 %v364, %v362
    %v371 = vpack.c.bf16 %v365, %v363
    %v372 = vpack.c.bf16 %v366, %v366
    %v373 = vpack.c.bf16 %v367, %v367
    %v374 = vld [vmem:[%s10] sm:$0xf]
    %v375 = vld [vmem:[%s10 + $0x4] sm:$0xf]
    %v376 = vld [vmem:[%s10 + $0x8] sm:$0x3]
    %v380 = vunpack.c.l.b16 %v374
    %v381 = vunpack.c.l.b16 %v375
    %v382 = vunpack.c.l.b16 %v376
    %v383 = vpack.c.b16 %v381, %v380
    %v384 = vpack.c.b16 %v382, %v382
    %vm385 = vcmask 277504
    %v387 = vsel %vm385, %v383, 0
    %v390 = vsel %vm385, %v384, 0
    %vm392 = vcmask 1040384
    %v394 = vsel %vm392, %v372, 0
    %v397 = vsel %vm392, %v373, 0
    %399 = vmatpush.bf16.msra.mxu0 0
    %400 = vmatpush.bf16.msra.mxu0 0
    %401 = vmatpush.bf16.msra.mxu0 0
    %402 = vmatpush.bf16.msra.mxu0 0
    %403 = vmatpush.bf16.msra.mxu0 0
    %404 = vmatpush.bf16.msra.mxu0 %v394
    %405 = vmatpush.bf16.msra.mxu0 %v370
    %406 = vmatpush.bf16.msra.mxu0 %v368
    %407 = vmatmul.bf16.gmra.mxu0 %v387
    %v408 = vpop.f32.mrf.mxu0
    %v409 = vadd.f32 0.0, %v408
    %v410 = vpop.f32.mrf.mxu0
    %v411 = vadd.f32 0.0, %v410
    %412 = vmatmul.bf16.gmra.mxu0 %v390
    %v413 = vpop.f32.mrf.mxu0
    %v414 = vadd.f32 0.0, %v413
    %v415 = vpop.f32.mrf.mxu0
    %416 = vdwg.mxu0
    %417 = vmatpush.bf16.msra.mxu0 0
    %418 = vmatpush.bf16.msra.mxu0 0
    %419 = vmatpush.bf16.msra.mxu0 0
    %420 = vmatpush.bf16.msra.mxu0 0
    %421 = vmatpush.bf16.msra.mxu0 0
    %422 = vmatpush.bf16.msra.mxu0 %v397
    %423 = vmatpush.bf16.msra.mxu0 %v371
    %424 = vmatpush.bf16.msra.mxu0 %v369
    %425 = vmatmul.bf16.gmra.mxu0 %v387
    %v426 = vpop.f32.mrf.mxu0
    %v427 = vadd.f32 0.0, %v426
    %v428 = vpop.f32.mrf.mxu0
    %v429 = vadd.f32 0.0, %v428
    %430 = vmatmul.bf16.gmra.mxu0 %v390
    %v431 = vpop.f32.mrf.mxu0
    %v432 = vadd.f32 0.0, %v431
    %v433 = vpop.f32.mrf.mxu0
    %434 = vdwg.mxu0
    %v435 = vld [vmem:[%s11] sm:$0xf]
    %v436 = vld [vmem:[%s11 + $0x4] sm:$0xf]
    %v437 = vld [vmem:[%s11 + $0x8] sm:$0x3]
    %v441 = vunpack.c.l.b16 %v435
    %v442 = vunpack.c.l.b16 %v436
    %v443 = vunpack.c.l.b16 %v437
    %v444 = vpack.c.b16 %v442, %v441
    %v445 = vpack.c.b16 %v443, %v443
    %v447 = vsel %vm385, %v444, 0
    %v450 = vsel %vm385, %v445, 0
    %452 = vmatpush.bf16.msra.mxu0 0
    %453 = vmatpush.bf16.msra.mxu0 0
    %454 = vmatpush.bf16.msra.mxu0 0
    %455 = vmatpush.bf16.msra.mxu0 0
    %456 = vmatpush.bf16.msra.mxu0 0
    %457 = vmatpush.bf16.msra.mxu0 %v394
    %458 = vmatpush.bf16.msra.mxu0 %v370
    %459 = vmatpush.bf16.msra.mxu0 %v368
    %460 = vmatmul.bf16.gmra.mxu0 %v447
    %v461 = vpop.f32.mrf.mxu0
    %v462 = vadd.f32 0.0, %v461
    %v463 = vpop.f32.mrf.mxu0
    %v464 = vadd.f32 0.0, %v463
    %465 = vmatmul.bf16.gmra.mxu0 %v450
    %v466 = vpop.f32.mrf.mxu0
    %v467 = vadd.f32 0.0, %v466
    %v468 = vpop.f32.mrf.mxu0
    %469 = vdwg.mxu0
    %470 = vmatpush.bf16.msra.mxu0 0
    %471 = vmatpush.bf16.msra.mxu0 0
    %472 = vmatpush.bf16.msra.mxu0 0
    %473 = vmatpush.bf16.msra.mxu0 0
    %474 = vmatpush.bf16.msra.mxu0 0
    %475 = vmatpush.bf16.msra.mxu0 %v397
    %476 = vmatpush.bf16.msra.mxu0 %v371
    %477 = vmatpush.bf16.msra.mxu0 %v369
    %478 = vmatmul.bf16.gmra.mxu0 %v447
    %v479 = vpop.f32.mrf.mxu0
    %v480 = vadd.f32 0.0, %v479
    %v481 = vpop.f32.mrf.mxu0
    %v482 = vadd.f32 0.0, %v481
    %483 = vmatmul.bf16.gmra.mxu0 %v450
    %v484 = vpop.f32.mrf.mxu0
    %v485 = vadd.f32 0.0, %v484
    %v486 = vpop.f32.mrf.mxu0
    %487 = vdwg.mxu0
    %v488 = vmax.f32 %v409, %v462
    %v489 = vmax.f32 %v427, %v480
    %v490 = vmax.f32 %v411, %v464
    %v491 = vmax.f32 %v429, %v482
    %v492 = vmax.f32 %v414, %v467
    %v493 = vmax.f32 %v432, %v485
    %v494 = vpack.c.bf16 %v490, %v488
    %v495 = vpack.c.bf16 %v491, %v489
    %v496 = vpack.c.bf16 %v492, %v492
    %v497 = vpack.c.bf16 %v493, %v493
    %v498 = vld [vmem:[%s12] sm:$0xf]
    %v499 = vld [vmem:[%s12 + $0x4] sm:$0xf]
    %v500 = vld [vmem:[%s12 + $0x8] sm:$0xf]
    %v501 = vld [vmem:[%s12 + $0xc] sm:$0xf]
    %v502 = vld [vmem:[%s12 + $0x10] sm:$0xf]
    %v503 = vld [vmem:[%s12 + $0x14] sm:$0xf]
    %v504 = vld [vmem:[%s12 + $0x18] sm:$0xf]
    %v505 = vld [vmem:[%s12 + $0x1c] sm:$0xf]
    %v506 = vld [vmem:[%s12 + $0x20] sm:$0xf]
    %v507 = vld [vmem:[%s12 + $0x24] sm:$0xf]
    %v508 = vld [vmem:[%s12 + $0x28] sm:$0xf]
    %v509 = vld [vmem:[%s12 + $0x2c] sm:$0xf]
    %v510 = vld [vmem:[%s12 + $0x30] sm:$0xf]
    %v511 = vld [vmem:[%s12 + $0x34] sm:$0xf]
    %v512 = vld [vmem:[%s12 + $0x38] sm:$0xf]
    %v513 = vld [vmem:[%s12 + $0x3c] sm:$0xf]
    %v514 = vld [vmem:[%s12 + $0x40] sm:$0xf]
    %v515 = vld [vmem:[%s12 + $0x44] sm:$0xf]
    %v516 = vld [vmem:[%s12 + $0x48] sm:$0xf]
    %v517 = vld [vmem:[%s12 + $0x4c] sm:$0xf]
    %v518 = vld [vmem:[%s12 + $0x50] sm:$0xf]
    %v519 = vld [vmem:[%s12 + $0x54] sm:$0xf]
    %v520 = vld [vmem:[%s12 + $0x58] sm:$0xf]
    %v521 = vld [vmem:[%s12 + $0x5c] sm:$0xf]
    %v522 = vld [vmem:[%s12 + $0x60] sm:$0xf]
    %v523 = vld [vmem:[%s12 + $0x64] sm:$0xf]
    %v524 = vld [vmem:[%s12 + $0x68] sm:$0xf]
    %v525 = vld [vmem:[%s12 + $0x6c] sm:$0xf]
    %v526 = vld [vmem:[%s12 + $0x70] sm:$0xf]
    %v527 = vld [vmem:[%s12 + $0x74] sm:$0xf]
    %v528 = vld [vmem:[%s12 + $0x78] sm:$0xf]
    %v529 = vld [vmem:[%s12 + $0x7c] sm:$0xf]
    %v562 = vunpack.c.l.b16 %v498
    %v563 = vunpack.c.l.b16 %v499
    %v564 = vunpack.c.l.b16 %v500
    %v565 = vunpack.c.l.b16 %v501
    %v566 = vunpack.c.l.b16 %v502
    %v567 = vunpack.c.l.b16 %v503
    %v568 = vunpack.c.l.b16 %v504
    %v569 = vunpack.c.l.b16 %v505
    %v570 = vunpack.c.l.b16 %v506
    %v571 = vunpack.c.l.b16 %v507
    %v572 = vunpack.c.l.b16 %v508
    %v573 = vunpack.c.l.b16 %v509
    %v574 = vunpack.c.l.b16 %v510
    %v575 = vunpack.c.l.b16 %v511
    %v576 = vunpack.c.l.b16 %v512
    %v577 = vunpack.c.l.b16 %v513
    %v578 = vunpack.c.l.b16 %v514
    %v579 = vunpack.c.l.b16 %v515
    %v580 = vunpack.c.l.b16 %v516
    %v581 = vunpack.c.l.b16 %v517
    %v582 = vunpack.c.l.b16 %v518
    %v583 = vunpack.c.l.b16 %v519
    %v584 = vunpack.c.l.b16 %v520
    %v585 = vunpack.c.l.b16 %v521
    %v586 = vunpack.c.l.b16 %v522
    %v587 = vunpack.c.l.b16 %v523
    %v588 = vunpack.c.l.b16 %v524
    %v589 = vunpack.c.l.b16 %v525
    %v590 = vunpack.c.l.b16 %v526
    %v591 = vunpack.c.l.b16 %v527
    %v592 = vunpack.c.l.b16 %v528
    %v593 = vunpack.c.l.b16 %v529
    %v594 = vpack.c.b16 %v563, %v562
    %v595 = vpack.c.b16 %v565, %v564
    %v596 = vpack.c.b16 %v567, %v566
    %v597 = vpack.c.b16 %v569, %v568
    %v598 = vpack.c.b16 %v571, %v570
    %v599 = vpack.c.b16 %v573, %v572
    %v600 = vpack.c.b16 %v575, %v574
    %v601 = vpack.c.b16 %v577, %v576
    %v602 = vpack.c.b16 %v579, %v578
    %v603 = vpack.c.b16 %v581, %v580
    %v604 = vpack.c.b16 %v583, %v582
    %v605 = vpack.c.b16 %v585, %v584
    %v606 = vpack.c.b16 %v587, %v586
    %v607 = vpack.c.b16 %v589, %v588
    %v608 = vpack.c.b16 %v591, %v590
    %v609 = vpack.c.b16 %v593, %v592
    %626 = vmatpush.bf16.msra.mxu0 %v601
    %627 = vmatpush.bf16.msra.mxu0 %v600
    %628 = vmatpush.bf16.msra.mxu0 %v599
    %629 = vmatpush.bf16.msra.mxu0 %v598
    %630 = vmatpush.bf16.msra.mxu0 %v597
    %631 = vmatpush.bf16.msra.mxu0 %v596
    %632 = vmatpush.bf16.msra.mxu0 %v595
    %633 = vmatpush.bf16.msra.mxu0 %v594
    %634 = vmatmul.bf16.gmra.mxu0 %v494
    %v635 = vpop.f32.mrf.mxu0
    %v636 = vadd.f32 0.0, %v635
    %v637 = vpop.f32.mrf.mxu0
    %v638 = vadd.f32 0.0, %v637
    %639 = vmatmul.bf16.gmra.mxu0 %v496
    %v640 = vpop.f32.mrf.mxu0
    %v641 = vadd.f32 0.0, %v640
    %v642 = vpop.f32.mrf.mxu0
    %643 = vdwg.mxu0
    %644 = vmatpush.bf16.msra.mxu0 %v609
    %645 = vmatpush.bf16.msra.mxu0 %v608
    %646 = vmatpush.bf16.msra.mxu0 %v607
    %647 = vmatpush.bf16.msra.mxu0 %v606
    %648 = vmatpush.bf16.msra.mxu0 %v605
    %649 = vmatpush.bf16.msra.mxu0 %v604
    %650 = vmatpush.bf16.msra.mxu0 %v603
    %651 = vmatpush.bf16.msra.mxu0 %v602
    %652 = vmatmul.bf16.gmra.mxu0 %v495
    %v653 = vpop.f32.mrf.mxu0
    %v654 = vadd.f32 %v636, %v653
    %v655 = vpop.f32.mrf.mxu0
    %v656 = vadd.f32 %v638, %v655
    %657 = vmatmul.bf16.gmra.mxu0 %v497
    %v658 = vpop.f32.mrf.mxu0
    %v659 = vadd.f32 %v641, %v658
    %v660 = vpop.f32.mrf.mxu0
    %661 = vdwg.mxu0
    %v662 = vld [vmem:[%s13] sm:$0xf]
    %v663 = vld [vmem:[%s13 + $0x4] sm:$0xf]
    %v664 = vld [vmem:[%s13 + $0x8] sm:$0xf]
    %v665 = vld [vmem:[%s13 + $0xc] sm:$0xf]
    %v666 = vld [vmem:[%s13 + $0x10] sm:$0xf]
    %v667 = vld [vmem:[%s13 + $0x14] sm:$0xf]
    %v668 = vld [vmem:[%s13 + $0x18] sm:$0xf]
    %v669 = vld [vmem:[%s13 + $0x1c] sm:$0xf]
    %v670 = vld [vmem:[%s13 + $0x20] sm:$0xf]
    %v671 = vld [vmem:[%s13 + $0x24] sm:$0xf]
    %v672 = vld [vmem:[%s13 + $0x28] sm:$0xf]
    %v673 = vld [vmem:[%s13 + $0x2c] sm:$0xf]
    %v674 = vld [vmem:[%s13 + $0x30] sm:$0xf]
    %v675 = vld [vmem:[%s13 + $0x34] sm:$0xf]
    %v676 = vld [vmem:[%s13 + $0x38] sm:$0xf]
    %v677 = vld [vmem:[%s13 + $0x3c] sm:$0xf]
    %v678 = vld [vmem:[%s13 + $0x40] sm:$0xf]
    %v679 = vld [vmem:[%s13 + $0x44] sm:$0xf]
    %v680 = vld [vmem:[%s13 + $0x48] sm:$0xf]
    %v681 = vld [vmem:[%s13 + $0x4c] sm:$0xf]
    %v682 = vld [vmem:[%s13 + $0x50] sm:$0xf]
    %v683 = vld [vmem:[%s13 + $0x54] sm:$0xf]
    %v684 = vld [vmem:[%s13 + $0x58] sm:$0xf]
    %v685 = vld [vmem:[%s13 + $0x5c] sm:$0xf]
    %v686 = vld [vmem:[%s13 + $0x60] sm:$0xf]
    %v687 = vld [vmem:[%s13 + $0x64] sm:$0xf]
    %v688 = vld [vmem:[%s13 + $0x68] sm:$0xf]
    %v689 = vld [vmem:[%s13 + $0x6c] sm:$0xf]
    %v690 = vld [vmem:[%s13 + $0x70] sm:$0xf]
    %v691 = vld [vmem:[%s13 + $0x74] sm:$0xf]
    %v692 = vld [vmem:[%s13 + $0x78] sm:$0xf]
    %v693 = vld [vmem:[%s13 + $0x7c] sm:$0xf]
    %v726 = vunpack.c.l.b16 %v662
    %v727 = vunpack.c.l.b16 %v663
    %v728 = vunpack.c.l.b16 %v664
    %v729 = vunpack.c.l.b16 %v665
    %v730 = vunpack.c.l.b16 %v666
    %v731 = vunpack.c.l.b16 %v667
    %v732 = vunpack.c.l.b16 %v668
    %v733 = vunpack.c.l.b16 %v669
    %v734 = vunpack.c.l.b16 %v670
    %v735 = vunpack.c.l.b16 %v671
    %v736 = vunpack.c.l.b16 %v672
    %v737 = vunpack.c.l.b16 %v673
    %v738 = vunpack.c.l.b16 %v674
    %v739 = vunpack.c.l.b16 %v675
    %v740 = vunpack.c.l.b16 %v676
    %v741 = vunpack.c.l.b16 %v677
    %v742 = vunpack.c.l.b16 %v678
    %v743 = vunpack.c.l.b16 %v679
    %v744 = vunpack.c.l.b16 %v680
    %v745 = vunpack.c.l.b16 %v681
    %v746 = vunpack.c.l.b16 %v682
    %v747 = vunpack.c.l.b16 %v683
    %v748 = vunpack.c.l.b16 %v684
    %v749 = vunpack.c.l.b16 %v685
    %v750 = vunpack.c.l.b16 %v686
    %v751 = vunpack.c.l.b16 %v687
    %v752 = vunpack.c.l.b16 %v688
    %v753 = vunpack.c.l.b16 %v689
    %v754 = vunpack.c.l.b16 %v690
    %v755 = vunpack.c.l.b16 %v691
    %v756 = vunpack.c.l.b16 %v692
    %v757 = vunpack.c.l.b16 %v693
    %v758 = vpack.c.b16 %v727, %v726
    %v759 = vpack.c.b16 %v729, %v728
    %v760 = vpack.c.b16 %v731, %v730
    %v761 = vpack.c.b16 %v733, %v732
    %v762 = vpack.c.b16 %v735, %v734
    %v763 = vpack.c.b16 %v737, %v736
    %v764 = vpack.c.b16 %v739, %v738
    %v765 = vpack.c.b16 %v741, %v740
    %v766 = vpack.c.b16 %v743, %v742
    %v767 = vpack.c.b16 %v745, %v744
    %v768 = vpack.c.b16 %v747, %v746
    %v769 = vpack.c.b16 %v749, %v748
    %v770 = vpack.c.b16 %v751, %v750
    %v771 = vpack.c.b16 %v753, %v752
    %v772 = vpack.c.b16 %v755, %v754
    %v773 = vpack.c.b16 %v757, %v756
    %790 = vmatpush.bf16.msra.mxu0 %v765
    %791 = vmatpush.bf16.msra.mxu0 %v764
    %792 = vmatpush.bf16.msra.mxu0 %v763
    %793 = vmatpush.bf16.msra.mxu0 %v762
    %794 = vmatpush.bf16.msra.mxu0 %v761
    %795 = vmatpush.bf16.msra.mxu0 %v760
    %796 = vmatpush.bf16.msra.mxu0 %v759
    %797 = vmatpush.bf16.msra.mxu0 %v758
    %798 = vmatmul.bf16.gmra.mxu0 %v494
    %v799 = vpop.f32.mrf.mxu0
    %v800 = vadd.f32 0.0, %v799
    %v801 = vpop.f32.mrf.mxu0
    %v802 = vadd.f32 0.0, %v801
    %803 = vmatmul.bf16.gmra.mxu0 %v496
    %v804 = vpop.f32.mrf.mxu0
    %v805 = vadd.f32 0.0, %v804
    %v806 = vpop.f32.mrf.mxu0
    %807 = vdwg.mxu0
    %808 = vmatpush.bf16.msra.mxu0 %v773
    %809 = vmatpush.bf16.msra.mxu0 %v772
    %810 = vmatpush.bf16.msra.mxu0 %v771
    %811 = vmatpush.bf16.msra.mxu0 %v770
    %812 = vmatpush.bf16.msra.mxu0 %v769
    %813 = vmatpush.bf16.msra.mxu0 %v768
    %814 = vmatpush.bf16.msra.mxu0 %v767
    %815 = vmatpush.bf16.msra.mxu0 %v766
    %816 = vmatmul.bf16.gmra.mxu0 %v495
    %v817 = vpop.f32.mrf.mxu0
    %v818 = vadd.f32 %v800, %v817
    %v819 = vpop.f32.mrf.mxu0
    %v820 = vadd.f32 %v802, %v819
    %821 = vmatmul.bf16.gmra.mxu0 %v497
    %v822 = vpop.f32.mrf.mxu0
    %v823 = vadd.f32 %v805, %v822
    %v824 = vpop.f32.mrf.mxu0
    %825 = vdwg.mxu0
    %v826 = vmax.f32 %v654, %v818
    %v827 = vmax.f32 %v656, %v820
    %v828 = vmax.f32 %v659, %v823
    %v829 = vpack.c.bf16 %v826, %v826
    %v830 = vpack.c.bf16 %v827, %v827
    %v831 = vpack.c.bf16 %v828, %v828
    %v832 = vld [vmem:[%s4] sm:$0xff]
    %v833 = vld [vmem:[%s4 + $0x8] sm:$0xff]
    %v834 = vld [vmem:[%s4 + $0x10] sm:$0xff]
    %v835 = vld [vmem:[%s4 + $0x18] sm:$0xff]
    %v836 = vld [vmem:[%s4 + $0x20] sm:$0xff]
    %v837 = vld [vmem:[%s4 + $0x28] sm:$0xff]
    %v838 = vld [vmem:[%s4 + $0x30] sm:$0xff]
    %v839 = vld [vmem:[%s4 + $0x38] sm:$0xff]
    %v840 = vld [vmem:[%s4 + $0x40] sm:$0xff]
    %v841 = vld [vmem:[%s4 + $0x48] sm:$0xff]
    %v842 = vld [vmem:[%s4 + $0x50] sm:$0xff]
    %v843 = vld [vmem:[%s4 + $0x58] sm:$0xff]
    %v844 = vld [vmem:[%s4 + $0x60] sm:$0xff]
    %v845 = vld [vmem:[%s4 + $0x68] sm:$0xff]
    %v846 = vld [vmem:[%s4 + $0x70] sm:$0xff]
    %v847 = vld [vmem:[%s4 + $0x78] sm:$0xff]
    %s848 = scalar_lea.vmem %s4, 128
    %v849 = vld [vmem:[%s848] sm:$0xff]
    %v850 = vld [vmem:[%s848 + $0x8] sm:$0xff]
    %v851 = vld [vmem:[%s848 + $0x10] sm:$0xff]
    %v852 = vld [vmem:[%s848 + $0x18] sm:$0xff]
    %v853 = vld [vmem:[%s848 + $0x20] sm:$0xff]
    %v854 = vld [vmem:[%s848 + $0x28] sm:$0xff]
    %v855 = vld [vmem:[%s848 + $0x30] sm:$0xff]
    %v856 = vld [vmem:[%s848 + $0x38] sm:$0xff]
    %v857 = vld [vmem:[%s848 + $0x40] sm:$0xff]
    %v858 = vld [vmem:[%s848 + $0x48] sm:$0xff]
    %v859 = vld [vmem:[%s848 + $0x50] sm:$0xff]
    %v860 = vld [vmem:[%s848 + $0x58] sm:$0xff]
    %v861 = vld [vmem:[%s848 + $0x60] sm:$0xff]
    %v862 = vld [vmem:[%s848 + $0x68] sm:$0xff]
    %v863 = vld [vmem:[%s848 + $0x70] sm:$0xff]
    %v864 = vld [vmem:[%s848 + $0x78] sm:$0xff]
    %v868 = vunpack.c.l.b16 %v829
    %v869 = vunpack.c.l.b16 %v830
    %v870 = vunpack.c.l.b16 %v831
    %v871 = vpack.c.b16 %v869, %v868
    %v872 = vpack.c.b16 %v870, %v870
    %v874 = vshrl.u32 %v871, 16
    %v876 = vshll.u32 %v871, 16
    %v878 = vrot.slane %v876, 1
    %v879 = vor.u32 %v874, %v878
    %v881 = vshll.u32 %v872, 16
    %v883 = vrot.slane %v881, 1
    %v884 = vsel %vm90, %v879, %v883
    %v885 = vshrl.u32 %v872, 16
    %v887 = vor.u32 %v885, %v883
    %v906 = vunpack.c.l.b16 %v849
    %v907 = vunpack.c.h.b16 %v849
    %v908 = vunpack.c.l.b16 %v850
    %v909 = vunpack.c.h.b16 %v850
    %v910 = vunpack.c.l.b16 %v851
    %v911 = vunpack.c.h.b16 %v851
    %v912 = vunpack.c.l.b16 %v852
    %v913 = vunpack.c.h.b16 %v852
    %v914 = vunpack.c.l.b16 %v853
    %v915 = vunpack.c.h.b16 %v853
    %v916 = vunpack.c.l.b16 %v854
    %v917 = vunpack.c.h.b16 %v854
    %v918 = vunpack.c.l.b16 %v855
    %v919 = vunpack.c.h.b16 %v855
    %v920 = vunpack.c.l.b16 %v856
    %v921 = vunpack.c.h.b16 %v856
    %v922 = vunpack.c.l.b16 %v857
    %v923 = vunpack.c.h.b16 %v857
    %v924 = vunpack.c.l.b16 %v858
    %v925 = vunpack.c.h.b16 %v858
    %v926 = vunpack.c.l.b16 %v859
    %v927 = vunpack.c.h.b16 %v859
    %v928 = vunpack.c.l.b16 %v860
    %v929 = vunpack.c.h.b16 %v860
    %v930 = vunpack.c.l.b16 %v861
    %v931 = vunpack.c.h.b16 %v861
    %v932 = vunpack.c.l.b16 %v862
    %v933 = vunpack.c.h.b16 %v862
    %v934 = vunpack.c.l.b16 %v863
    %v935 = vunpack.c.h.b16 %v863
    %v936 = vunpack.c.l.b16 %v864
    %v937 = vunpack.c.h.b16 %v864
    %v938 = vpack.c.b16 %v908, %v906
    %v939 = vpack.c.b16 %v909, %v907
    %v940 = vpack.c.b16 %v912, %v910
    %v941 = vpack.c.b16 %v913, %v911
    %v942 = vpack.c.b16 %v916, %v914
    %v943 = vpack.c.b16 %v917, %v915
    %v944 = vpack.c.b16 %v920, %v918
    %v945 = vpack.c.b16 %v921, %v919
    %v946 = vpack.c.b16 %v924, %v922
    %v947 = vpack.c.b16 %v925, %v923
    %v948 = vpack.c.b16 %v928, %v926
    %v949 = vpack.c.b16 %v929, %v927
    %v950 = vpack.c.b16 %v932, %v930
    %v951 = vpack.c.b16 %v933, %v931
    %v952 = vpack.c.b16 %v936, %v934
    %v953 = vpack.c.b16 %v937, %v935
    %970 = vmatpush.bf16.msra.mxu0 %v952
    %971 = vmatpush.bf16.msra.mxu0 %v950
    %972 = vmatpush.bf16.msra.mxu0 %v948
    %973 = vmatpush.bf16.msra.mxu0 %v946
    %974 = vmatpush.bf16.msra.mxu0 %v944
    %975 = vmatpush.bf16.msra.mxu0 %v942
    %976 = vmatpush.bf16.msra.mxu0 %v940
    %977 = vmatpush.bf16.msra.mxu0 %v938
    %978 = vmatmul.bf16.gmra.mxu0 %v884
    %v979 = vpop.f32.mrf.mxu0
    %v980 = vadd.f32 0.0, %v979
    %v981 = vpop.f32.mrf.mxu0
    %v982 = vadd.f32 0.0, %v981
    %983 = vmatmul.bf16.gmra.mxu0 %v887
    %v984 = vpop.f32.mrf.mxu0
    %v985 = vadd.f32 0.0, %v984
    %v986 = vpop.f32.mrf.mxu0
    %987 = vdwg.mxu0
    %988 = vmatpush.bf16.msra.mxu0 %v953
    %989 = vmatpush.bf16.msra.mxu0 %v951
    %990 = vmatpush.bf16.msra.mxu0 %v949
    %991 = vmatpush.bf16.msra.mxu0 %v947
    %992 = vmatpush.bf16.msra.mxu0 %v945
    %993 = vmatpush.bf16.msra.mxu0 %v943
    %994 = vmatpush.bf16.msra.mxu0 %v941
    %995 = vmatpush.bf16.msra.mxu0 %v939
    %996 = vmatmul.bf16.gmra.mxu0 %v884
    %v997 = vpop.f32.mrf.mxu0
    %v998 = vadd.f32 0.0, %v997
    %v999 = vpop.f32.mrf.mxu0
    %v1000 = vadd.f32 0.0, %v999
    %1001 = vmatmul.bf16.gmra.mxu0 %v887
    %v1002 = vpop.f32.mrf.mxu0
    %v1003 = vadd.f32 0.0, %v1002
    %v1004 = vpop.f32.mrf.mxu0
    %1005 = vdwg.mxu0
    %v1024 = vunpack.c.l.b16 %v832
    %v1025 = vunpack.c.h.b16 %v832
    %v1026 = vunpack.c.l.b16 %v833
    %v1027 = vunpack.c.h.b16 %v833
    %v1028 = vunpack.c.l.b16 %v834
    %v1029 = vunpack.c.h.b16 %v834
    %v1030 = vunpack.c.l.b16 %v835
    %v1031 = vunpack.c.h.b16 %v835
    %v1032 = vunpack.c.l.b16 %v836
    %v1033 = vunpack.c.h.b16 %v836
    %v1034 = vunpack.c.l.b16 %v837
    %v1035 = vunpack.c.h.b16 %v837
    %v1036 = vunpack.c.l.b16 %v838
    %v1037 = vunpack.c.h.b16 %v838
    %v1038 = vunpack.c.l.b16 %v839
    %v1039 = vunpack.c.h.b16 %v839
    %v1040 = vunpack.c.l.b16 %v840
    %v1041 = vunpack.c.h.b16 %v840
    %v1042 = vunpack.c.l.b16 %v841
    %v1043 = vunpack.c.h.b16 %v841
    %v1044 = vunpack.c.l.b16 %v842
    %v1045 = vunpack.c.h.b16 %v842
    %v1046 = vunpack.c.l.b16 %v843
    %v1047 = vunpack.c.h.b16 %v843
    %v1048 = vunpack.c.l.b16 %v844
    %v1049 = vunpack.c.h.b16 %v844
    %v1050 = vunpack.c.l.b16 %v845
    %v1051 = vunpack.c.h.b16 %v845
    %v1052 = vunpack.c.l.b16 %v846
    %v1053 = vunpack.c.h.b16 %v846
    %v1054 = vunpack.c.l.b16 %v847
    %v1055 = vunpack.c.h.b16 %v847
    %v1056 = vpack.c.b16 %v1026, %v1024
    %v1057 = vpack.c.b16 %v1027, %v1025
    %v1058 = vpack.c.b16 %v1030, %v1028
    %v1059 = vpack.c.b16 %v1031, %v1029
    %v1060 = vpack.c.b16 %v1034, %v1032
    %v1061 = vpack.c.b16 %v1035, %v1033
    %v1062 = vpack.c.b16 %v1038, %v1036
    %v1063 = vpack.c.b16 %v1039, %v1037
    %v1064 = vpack.c.b16 %v1042, %v1040
    %v1065 = vpack.c.b16 %v1043, %v1041
    %v1066 = vpack.c.b16 %v1046, %v1044
    %v1067 = vpack.c.b16 %v1047, %v1045
    %v1068 = vpack.c.b16 %v1050, %v1048
    %v1069 = vpack.c.b16 %v1051, %v1049
    %v1070 = vpack.c.b16 %v1054, %v1052
    %v1071 = vpack.c.b16 %v1055, %v1053
    %1088 = vmatpush.bf16.msra.mxu0 %v1070
    %1089 = vmatpush.bf16.msra.mxu0 %v1068
    %1090 = vmatpush.bf16.msra.mxu0 %v1066
    %1091 = vmatpush.bf16.msra.mxu0 %v1064
    %1092 = vmatpush.bf16.msra.mxu0 %v1062
    %1093 = vmatpush.bf16.msra.mxu0 %v1060
    %1094 = vmatpush.bf16.msra.mxu0 %v1058
    %1095 = vmatpush.bf16.msra.mxu0 %v1056
    %1096 = vmatmul.bf16.gmra.mxu0 %v871
    %v1097 = vpop.f32.mrf.mxu0
    %v1098 = vadd.f32 %v980, %v1097
    %v1099 = vpop.f32.mrf.mxu0
    %v1100 = vadd.f32 %v982, %v1099
    %1101 = vmatmul.bf16.gmra.mxu0 %v872
    %v1102 = vpop.f32.mrf.mxu0
    %v1103 = vadd.f32 %v985, %v1102
    %v1104 = vpop.f32.mrf.mxu0
    %1105 = vdwg.mxu0
    %1106 = vmatpush.bf16.msra.mxu0 %v1071
    %1107 = vmatpush.bf16.msra.mxu0 %v1069
    %1108 = vmatpush.bf16.msra.mxu0 %v1067
    %1109 = vmatpush.bf16.msra.mxu0 %v1065
    %1110 = vmatpush.bf16.msra.mxu0 %v1063
    %1111 = vmatpush.bf16.msra.mxu0 %v1061
    %1112 = vmatpush.bf16.msra.mxu0 %v1059
    %1113 = vmatpush.bf16.msra.mxu0 %v1057
    %1114 = vmatmul.bf16.gmra.mxu0 %v871
    %v1115 = vpop.f32.mrf.mxu0
    %v1116 = vadd.f32 %v998, %v1115
    %v1117 = vpop.f32.mrf.mxu0
    %v1118 = vadd.f32 %v1000, %v1117
    %1119 = vmatmul.bf16.gmra.mxu0 %v872
    %v1120 = vpop.f32.mrf.mxu0
    %v1121 = vadd.f32 %v1003, %v1120
    %v1122 = vpop.f32.mrf.mxu0
    %1123 = vdwg.mxu0
    %s1124 = scalar_lea.vmem %s4, 256
    %v1125 = vld [vmem:[%s1124] sm:$0xff]
    %v1126 = vld [vmem:[%s1124 + $0x8] sm:$0xff]
    %v1127 = vld [vmem:[%s1124 + $0x10] sm:$0xff]
    %v1128 = vld [vmem:[%s1124 + $0x18] sm:$0xff]
    %v1129 = vld [vmem:[%s1124 + $0x20] sm:$0xff]
    %v1130 = vld [vmem:[%s1124 + $0x28] sm:$0xff]
    %v1131 = vld [vmem:[%s1124 + $0x30] sm:$0xff]
    %v1132 = vld [vmem:[%s1124 + $0x38] sm:$0xff]
    %v1133 = vld [vmem:[%s1124 + $0x40] sm:$0xff]
    %v1134 = vld [vmem:[%s1124 + $0x48] sm:$0xff]
    %v1135 = vld [vmem:[%s1124 + $0x50] sm:$0xff]
    %v1136 = vld [vmem:[%s1124 + $0x58] sm:$0xff]
    %v1137 = vld [vmem:[%s1124 + $0x60] sm:$0xff]
    %v1138 = vld [vmem:[%s1124 + $0x68] sm:$0xff]
    %v1139 = vld [vmem:[%s1124 + $0x70] sm:$0xff]
    %v1140 = vld [vmem:[%s1124 + $0x78] sm:$0xff]
    %v1141 = vrot.slane %v871, 1
    %v1142 = vrot.slane %v872, 1
    %v1143 = vsel %vm245, %v1141, %v1142
    %v1162 = vunpack.c.l.b16 %v1125
    %v1163 = vunpack.c.h.b16 %v1125
    %v1164 = vunpack.c.l.b16 %v1126
    %v1165 = vunpack.c.h.b16 %v1126
    %v1166 = vunpack.c.l.b16 %v1127
    %v1167 = vunpack.c.h.b16 %v1127
    %v1168 = vunpack.c.l.b16 %v1128
    %v1169 = vunpack.c.h.b16 %v1128
    %v1170 = vunpack.c.l.b16 %v1129
    %v1171 = vunpack.c.h.b16 %v1129
    %v1172 = vunpack.c.l.b16 %v1130
    %v1173 = vunpack.c.h.b16 %v1130
    %v1174 = vunpack.c.l.b16 %v1131
    %v1175 = vunpack.c.h.b16 %v1131
    %v1176 = vunpack.c.l.b16 %v1132
    %v1177 = vunpack.c.h.b16 %v1132
    %v1178 = vunpack.c.l.b16 %v1133
    %v1179 = vunpack.c.h.b16 %v1133
    %v1180 = vunpack.c.l.b16 %v1134
    %v1181 = vunpack.c.h.b16 %v1134
    %v1182 = vunpack.c.l.b16 %v1135
    %v1183 = vunpack.c.h.b16 %v1135
    %v1184 = vunpack.c.l.b16 %v1136
    %v1185 = vunpack.c.h.b16 %v1136
    %v1186 = vunpack.c.l.b16 %v1137
    %v1187 = vunpack.c.h.b16 %v1137
    %v1188 = vunpack.c.l.b16 %v1138
    %v1189 = vunpack.c.h.b16 %v1138
    %v1190 = vunpack.c.l.b16 %v1139
    %v1191 = vunpack.c.h.b16 %v1139
    %v1192 = vunpack.c.l.b16 %v1140
    %v1193 = vunpack.c.h.b16 %v1140
    %v1194 = vpack.c.b16 %v1164, %v1162
    %v1195 = vpack.c.b16 %v1165, %v1163
    %v1196 = vpack.c.b16 %v1168, %v1166
    %v1197 = vpack.c.b16 %v1169, %v1167
    %v1198 = vpack.c.b16 %v1172, %v1170
    %v1199 = vpack.c.b16 %v1173, %v1171
    %v1200 = vpack.c.b16 %v1176, %v1174
    %v1201 = vpack.c.b16 %v1177, %v1175
    %v1202 = vpack.c.b16 %v1180, %v1178
    %v1203 = vpack.c.b16 %v1181, %v1179
    %v1204 = vpack.c.b16 %v1184, %v1182
    %v1205 = vpack.c.b16 %v1185, %v1183
    %v1206 = vpack.c.b16 %v1188, %v1186
    %v1207 = vpack.c.b16 %v1189, %v1187
    %v1208 = vpack.c.b16 %v1192, %v1190
    %v1209 = vpack.c.b16 %v1193, %v1191
    %1226 = vmatpush.bf16.msra.mxu0 %v1208
    %1227 = vmatpush.bf16.msra.mxu0 %v1206
    %1228 = vmatpush.bf16.msra.mxu0 %v1204
    %1229 = vmatpush.bf16.msra.mxu0 %v1202
    %1230 = vmatpush.bf16.msra.mxu0 %v1200
    %1231 = vmatpush.bf16.msra.mxu0 %v1198
    %1232 = vmatpush.bf16.msra.mxu0 %v1196
    %1233 = vmatpush.bf16.msra.mxu0 %v1194
    %1234 = vmatmul.bf16.gmra.mxu0 %v1143
    %v1235 = vpop.f32.mrf.mxu0
    %v1236 = vadd.f32 0.0, %v1235
    %v1237 = vpop.f32.mrf.mxu0
    %v1238 = vadd.f32 0.0, %v1237
    %1239 = vmatmul.bf16.gmra.mxu0 %v1142
    %v1240 = vpop.f32.mrf.mxu0
    %v1241 = vadd.f32 0.0, %v1240
    %v1242 = vpop.f32.mrf.mxu0
    %1243 = vdwg.mxu0
    %1244 = vmatpush.bf16.msra.mxu0 %v1209
    %1245 = vmatpush.bf16.msra.mxu0 %v1207
    %1246 = vmatpush.bf16.msra.mxu0 %v1205
    %1247 = vmatpush.bf16.msra.mxu0 %v1203
    %1248 = vmatpush.bf16.msra.mxu0 %v1201
    %1249 = vmatpush.bf16.msra.mxu0 %v1199
    %1250 = vmatpush.bf16.msra.mxu0 %v1197
    %1251 = vmatpush.bf16.msra.mxu0 %v1195
    %1252 = vmatmul.bf16.gmra.mxu0 %v1143
    %v1253 = vpop.f32.mrf.mxu0
    %v1254 = vadd.f32 0.0, %v1253
    %v1255 = vpop.f32.mrf.mxu0
    %v1256 = vadd.f32 0.0, %v1255
    %1257 = vmatmul.bf16.gmra.mxu0 %v1142
    %v1258 = vpop.f32.mrf.mxu0
    %v1259 = vadd.f32 0.0, %v1258
    %v1260 = vpop.f32.mrf.mxu0
    %1261 = vdwg.mxu0
    %v1262 = vadd.f32 %v1098, %v1236
    %v1263 = vadd.f32 %v1116, %v1254
    %v1264 = vadd.f32 %v1100, %v1238
    %v1265 = vadd.f32 %v1118, %v1256
    %v1266 = vadd.f32 %v1103, %v1241
    %v1267 = vadd.f32 %v1121, %v1259
    %v1268 = vld [vmem:[%s5] sm:$0x3]
    %v1270 = vperm.slane %v1268, 0
    %v1271 = vperm.slane %v1268, 1
    %v1274 = vmul.f32 %v1262, %v1270
    %v1275 = vmul.f32 %v1263, %v1271
    %v1276 = vmul.f32 %v1264, %v1270
    %v1277 = vmul.f32 %v1265, %v1271
    %v1278 = vmul.f32 %v1266, %v1270
    %v1279 = vmul.f32 %v1267, %v1271
    %v1280 = vld [vmem:[%s6] sm:$0x3]
    %v1282 = vperm.slane %v1280, 0
    %v1283 = vperm.slane %v1280, 1
    %v1286 = vadd.f32 %v1274, %v1282
    %v1287 = vadd.f32 %v1275, %v1283
    %v1288 = vadd.f32 %v1276, %v1282
    %v1289 = vadd.f32 %v1277, %v1283
    %v1290 = vadd.f32 %v1278, %v1282
    %v1291 = vadd.f32 %v1279, %v1283
    %v1292 = vmax.f32 %v1286, 0.0
    %v1293 = vmax.f32 %v1287, 0.0
    %v1294 = vmax.f32 %v1288, 0.0
    %v1295 = vmax.f32 %v1289, 0.0
    %v1296 = vmax.f32 %v1290, 0.0
    %v1297 = vmax.f32 %v1291, 0.0
    %v1298 = vpack.c.bf16 %v1294, %v1292
    %v1299 = vpack.c.bf16 %v1295, %v1293
    %v1300 = vpack.c.bf16 %v1296, %v1296
    %v1301 = vpack.c.bf16 %v1297, %v1297
    %v1302 = vld [vmem:[%s14] sm:$0xf]
    %v1303 = vld [vmem:[%s14 + $0x4] sm:$0x3]
    %v1306 = vunpack.c.l.b16 %v1302
    %v1307 = vunpack.c.l.b16 %v1303
    %v1308 = vpack.c.b16 %v1307, %v1306
    %vm1309 = vcmask 146432
    %v1311 = vsel %vm1309, %v1308, 0
    %v1314 = vsel %vm392, %v1300, 0
    %v1317 = vsel %vm392, %v1301, 0
    %1319 = vmatpush.bf16.msra.mxu0 0
    %1320 = vmatpush.bf16.msra.mxu0 0
    %1321 = vmatpush.bf16.msra.mxu0 0
    %1322 = vmatpush.bf16.msra.mxu0 0
    %1323 = vmatpush.bf16.msra.mxu0 0
    %1324 = vmatpush.bf16.msra.mxu0 0
    %1325 = vmatpush.bf16.msra.mxu0 %v1314
    %1326 = vmatpush.bf16.msra.mxu0 %v1298
    %1327 = vmatmul.bf16.gmra.mxu0 %v1311
    %v1328 = vpop.f32.mrf.mxu0
    %v1329 = vadd.f32 0.0, %v1328
    %v1330 = vpop.f32.mrf.mxu0
    %v1331 = vadd.f32 0.0, %v1330
    %1332 = vdwg.mxu0
    %1333 = vmatpush.bf16.msra.mxu0 0
    %1334 = vmatpush.bf16.msra.mxu0 0
    %1335 = vmatpush.bf16.msra.mxu0 0
    %1336 = vmatpush.bf16.msra.mxu0 0
    %1337 = vmatpush.bf16.msra.mxu0 0
    %1338 = vmatpush.bf16.msra.mxu0 0
    %1339 = vmatpush.bf16.msra.mxu0 %v1317
    %1340 = vmatpush.bf16.msra.mxu0 %v1299
    %1341 = vmatmul.bf16.gmra.mxu0 %v1311
    %v1342 = vpop.f32.mrf.mxu0
    %v1343 = vadd.f32 0.0, %v1342
    %v1344 = vpop.f32.mrf.mxu0
    %v1345 = vadd.f32 0.0, %v1344
    %1346 = vdwg.mxu0
    %v1347 = vld [vmem:[%s15] sm:$0xf]
    %v1348 = vld [vmem:[%s15 + $0x4] sm:$0x3]
    %v1351 = vunpack.c.l.b16 %v1347
    %v1352 = vunpack.c.l.b16 %v1348
    %v1353 = vpack.c.b16 %v1352, %v1351
    %v1355 = vsel %vm1309, %v1353, 0
    %1357 = vmatpush.bf16.msra.mxu0 0
    %1358 = vmatpush.bf16.msra.mxu0 0
    %1359 = vmatpush.bf16.msra.mxu0 0
    %1360 = vmatpush.bf16.msra.mxu0 0
    %1361 = vmatpush.bf16.msra.mxu0 0
    %1362 = vmatpush.bf16.msra.mxu0 0
    %1363 = vmatpush.bf16.msra.mxu0 %v1314
    %1364 = vmatpush.bf16.msra.mxu0 %v1298
    %1365 = vmatmul.bf16.gmra.mxu0 %v1355
    %v1366 = vpop.f32.mrf.mxu0
    %v1367 = vadd.f32 0.0, %v1366
    %v1368 = vpop.f32.mrf.mxu0
    %v1369 = vadd.f32 0.0, %v1368
    %1370 = vdwg.mxu0
    %1371 = vmatpush.bf16.msra.mxu0 0
    %1372 = vmatpush.bf16.msra.mxu0 0
    %1373 = vmatpush.bf16.msra.mxu0 0
    %1374 = vmatpush.bf16.msra.mxu0 0
    %1375 = vmatpush.bf16.msra.mxu0 0
    %1376 = vmatpush.bf16.msra.mxu0 0
    %1377 = vmatpush.bf16.msra.mxu0 %v1317
    %1378 = vmatpush.bf16.msra.mxu0 %v1299
    %1379 = vmatmul.bf16.gmra.mxu0 %v1355
    %v1380 = vpop.f32.mrf.mxu0
    %v1381 = vadd.f32 0.0, %v1380
    %v1382 = vpop.f32.mrf.mxu0
    %v1383 = vadd.f32 0.0, %v1382
    %1384 = vdwg.mxu0
    %v1385 = vmax.f32 %v1329, %v1367
    %v1386 = vmax.f32 %v1343, %v1381
    %v1387 = vmax.f32 %v1331, %v1369
    %v1388 = vmax.f32 %v1345, %v1383
    %v1389 = vpack.c.bf16 %v1387, %v1385
    %v1390 = vpack.c.bf16 %v1388, %v1386
    %v1391 = vld [vmem:[%s16] sm:$0xf]
    %v1392 = vld [vmem:[%s16 + $0x4] sm:$0xf]
    %v1393 = vld [vmem:[%s16 + $0x8] sm:$0xf]
    %v1394 = vld [vmem:[%s16 + $0xc] sm:$0xf]
    %v1395 = vld [vmem:[%s16 + $0x10] sm:$0xf]
    %v1396 = vld [vmem:[%s16 + $0x14] sm:$0xf]
    %v1397 = vld [vmem:[%s16 + $0x18] sm:$0xf]
    %v1398 = vld [vmem:[%s16 + $0x1c] sm:$0xf]
    %v1399 = vld [vmem:[%s16 + $0x20] sm:$0xf]
    %v1400 = vld [vmem:[%s16 + $0x24] sm:$0xf]
    %v1401 = vld [vmem:[%s16 + $0x28] sm:$0xf]
    %v1402 = vld [vmem:[%s16 + $0x2c] sm:$0xf]
    %v1403 = vld [vmem:[%s16 + $0x30] sm:$0xf]
    %v1404 = vld [vmem:[%s16 + $0x34] sm:$0xf]
    %v1405 = vld [vmem:[%s16 + $0x38] sm:$0xf]
    %v1406 = vld [vmem:[%s16 + $0x3c] sm:$0xf]
    %v1407 = vld [vmem:[%s16 + $0x40] sm:$0xf]
    %v1408 = vld [vmem:[%s16 + $0x44] sm:$0xf]
    %v1409 = vld [vmem:[%s16 + $0x48] sm:$0xf]
    %v1410 = vld [vmem:[%s16 + $0x4c] sm:$0xf]
    %v1411 = vld [vmem:[%s16 + $0x50] sm:$0xf]
    %v1412 = vld [vmem:[%s16 + $0x54] sm:$0xf]
    %v1413 = vld [vmem:[%s16 + $0x58] sm:$0xf]
    %v1414 = vld [vmem:[%s16 + $0x5c] sm:$0xf]
    %v1415 = vld [vmem:[%s16 + $0x60] sm:$0xf]
    %v1416 = vld [vmem:[%s16 + $0x64] sm:$0xf]
    %v1417 = vld [vmem:[%s16 + $0x68] sm:$0xf]
    %v1418 = vld [vmem:[%s16 + $0x6c] sm:$0xf]
    %v1419 = vld [vmem:[%s16 + $0x70] sm:$0xf]
    %v1420 = vld [vmem:[%s16 + $0x74] sm:$0xf]
    %v1421 = vld [vmem:[%s16 + $0x78] sm:$0xf]
    %v1422 = vld [vmem:[%s16 + $0x7c] sm:$0xf]
    %v1455 = vunpack.c.l.b16 %v1391
    %v1456 = vunpack.c.l.b16 %v1392
    %v1457 = vunpack.c.l.b16 %v1393
    %v1458 = vunpack.c.l.b16 %v1394
    %v1459 = vunpack.c.l.b16 %v1395
    %v1460 = vunpack.c.l.b16 %v1396
    %v1461 = vunpack.c.l.b16 %v1397
    %v1462 = vunpack.c.l.b16 %v1398
    %v1463 = vunpack.c.l.b16 %v1399
    %v1464 = vunpack.c.l.b16 %v1400
    %v1465 = vunpack.c.l.b16 %v1401
    %v1466 = vunpack.c.l.b16 %v1402
    %v1467 = vunpack.c.l.b16 %v1403
    %v1468 = vunpack.c.l.b16 %v1404
    %v1469 = vunpack.c.l.b16 %v1405
    %v1470 = vunpack.c.l.b16 %v1406
    %v1471 = vunpack.c.l.b16 %v1407
    %v1472 = vunpack.c.l.b16 %v1408
    %v1473 = vunpack.c.l.b16 %v1409
    %v1474 = vunpack.c.l.b16 %v1410
    %v1475 = vunpack.c.l.b16 %v1411
    %v1476 = vunpack.c.l.b16 %v1412
    %v1477 = vunpack.c.l.b16 %v1413
    %v1478 = vunpack.c.l.b16 %v1414
    %v1479 = vunpack.c.l.b16 %v1415
    %v1480 = vunpack.c.l.b16 %v1416
    %v1481 = vunpack.c.l.b16 %v1417
    %v1482 = vunpack.c.l.b16 %v1418
    %v1483 = vunpack.c.l.b16 %v1419
    %v1484 = vunpack.c.l.b16 %v1420
    %v1485 = vunpack.c.l.b16 %v1421
    %v1486 = vunpack.c.l.b16 %v1422
    %v1487 = vpack.c.b16 %v1456, %v1455
    %v1488 = vpack.c.b16 %v1458, %v1457
    %v1489 = vpack.c.b16 %v1460, %v1459
    %v1490 = vpack.c.b16 %v1462, %v1461
    %v1491 = vpack.c.b16 %v1464, %v1463
    %v1492 = vpack.c.b16 %v1466, %v1465
    %v1493 = vpack.c.b16 %v1468, %v1467
    %v1494 = vpack.c.b16 %v1470, %v1469
    %v1495 = vpack.c.b16 %v1472, %v1471
    %v1496 = vpack.c.b16 %v1474, %v1473
    %v1497 = vpack.c.b16 %v1476, %v1475
    %v1498 = vpack.c.b16 %v1478, %v1477
    %v1499 = vpack.c.b16 %v1480, %v1479
    %v1500 = vpack.c.b16 %v1482, %v1481
    %v1501 = vpack.c.b16 %v1484, %v1483
    %v1502 = vpack.c.b16 %v1486, %v1485
    %1519 = vmatpush.bf16.msra.mxu0 %v1494
    %1520 = vmatpush.bf16.msra.mxu0 %v1493
    %1521 = vmatpush.bf16.msra.mxu0 %v1492
    %1522 = vmatpush.bf16.msra.mxu0 %v1491
    %1523 = vmatpush.bf16.msra.mxu0 %v1490
    %1524 = vmatpush.bf16.msra.mxu0 %v1489
    %1525 = vmatpush.bf16.msra.mxu0 %v1488
    %1526 = vmatpush.bf16.msra.mxu0 %v1487
    %1527 = vmatmul.bf16.gmra.mxu0 %v1389
    %v1528 = vpop.f32.mrf.mxu0
    %v1529 = vadd.f32 0.0, %v1528
    %v1530 = vpop.f32.mrf.mxu0
    %v1531 = vadd.f32 0.0, %v1530
    %1532 = vdwg.mxu0
    %1533 = vmatpush.bf16.msra.mxu0 %v1502
    %1534 = vmatpush.bf16.msra.mxu0 %v1501
    %1535 = vmatpush.bf16.msra.mxu0 %v1500
    %1536 = vmatpush.bf16.msra.mxu0 %v1499
    %1537 = vmatpush.bf16.msra.mxu0 %v1498
    %1538 = vmatpush.bf16.msra.mxu0 %v1497
    %1539 = vmatpush.bf16.msra.mxu0 %v1496
    %1540 = vmatpush.bf16.msra.mxu0 %v1495
    %1541 = vmatmul.bf16.gmra.mxu0 %v1390
    %v1542 = vpop.f32.mrf.mxu0
    %v1543 = vadd.f32 %v1529, %v1542
    %v1544 = vpop.f32.mrf.mxu0
    %v1545 = vadd.f32 %v1531, %v1544
    %1546 = vdwg.mxu0
    %v1547 = vld [vmem:[%s17] sm:$0xf]
    %v1548 = vld [vmem:[%s17 + $0x4] sm:$0xf]
    %v1549 = vld [vmem:[%s17 + $0x8] sm:$0xf]
    %v1550 = vld [vmem:[%s17 + $0xc] sm:$0xf]
    %v1551 = vld [vmem:[%s17 + $0x10] sm:$0xf]
    %v1552 = vld [vmem:[%s17 + $0x14] sm:$0xf]
    %v1553 = vld [vmem:[%s17 + $0x18] sm:$0xf]
    %v1554 = vld [vmem:[%s17 + $0x1c] sm:$0xf]
    %v1555 = vld [vmem:[%s17 + $0x20] sm:$0xf]
    %v1556 = vld [vmem:[%s17 + $0x24] sm:$0xf]
    %v1557 = vld [vmem:[%s17 + $0x28] sm:$0xf]
    %v1558 = vld [vmem:[%s17 + $0x2c] sm:$0xf]
    %v1559 = vld [vmem:[%s17 + $0x30] sm:$0xf]
    %v1560 = vld [vmem:[%s17 + $0x34] sm:$0xf]
    %v1561 = vld [vmem:[%s17 + $0x38] sm:$0xf]
    %v1562 = vld [vmem:[%s17 + $0x3c] sm:$0xf]
    %v1563 = vld [vmem:[%s17 + $0x40] sm:$0xf]
    %v1564 = vld [vmem:[%s17 + $0x44] sm:$0xf]
    %v1565 = vld [vmem:[%s17 + $0x48] sm:$0xf]
    %v1566 = vld [vmem:[%s17 + $0x4c] sm:$0xf]
    %v1567 = vld [vmem:[%s17 + $0x50] sm:$0xf]
    %v1568 = vld [vmem:[%s17 + $0x54] sm:$0xf]
    %v1569 = vld [vmem:[%s17 + $0x58] sm:$0xf]
    %v1570 = vld [vmem:[%s17 + $0x5c] sm:$0xf]
    %v1571 = vld [vmem:[%s17 + $0x60] sm:$0xf]
    %v1572 = vld [vmem:[%s17 + $0x64] sm:$0xf]
    %v1573 = vld [vmem:[%s17 + $0x68] sm:$0xf]
    %v1574 = vld [vmem:[%s17 + $0x6c] sm:$0xf]
    %v1575 = vld [vmem:[%s17 + $0x70] sm:$0xf]
    %v1576 = vld [vmem:[%s17 + $0x74] sm:$0xf]
    %v1577 = vld [vmem:[%s17 + $0x78] sm:$0xf]
    %v1578 = vld [vmem:[%s17 + $0x7c] sm:$0xf]
    %v1611 = vunpack.c.l.b16 %v1547
    %v1612 = vunpack.c.l.b16 %v1548
    %v1613 = vunpack.c.l.b16 %v1549
    %v1614 = vunpack.c.l.b16 %v1550
    %v1615 = vunpack.c.l.b16 %v1551
    %v1616 = vunpack.c.l.b16 %v1552
    %v1617 = vunpack.c.l.b16 %v1553
    %v1618 = vunpack.c.l.b16 %v1554
    %v1619 = vunpack.c.l.b16 %v1555
    %v1620 = vunpack.c.l.b16 %v1556
    %v1621 = vunpack.c.l.b16 %v1557
    %v1622 = vunpack.c.l.b16 %v1558
    %v1623 = vunpack.c.l.b16 %v1559
    %v1624 = vunpack.c.l.b16 %v1560
    %v1625 = vunpack.c.l.b16 %v1561
    %v1626 = vunpack.c.l.b16 %v1562
    %v1627 = vunpack.c.l.b16 %v1563
    %v1628 = vunpack.c.l.b16 %v1564
    %v1629 = vunpack.c.l.b16 %v1565
    %v1630 = vunpack.c.l.b16 %v1566
    %v1631 = vunpack.c.l.b16 %v1567
    %v1632 = vunpack.c.l.b16 %v1568
    %v1633 = vunpack.c.l.b16 %v1569
    %v1634 = vunpack.c.l.b16 %v1570
    %v1635 = vunpack.c.l.b16 %v1571
    %v1636 = vunpack.c.l.b16 %v1572
    %v1637 = vunpack.c.l.b16 %v1573
    %v1638 = vunpack.c.l.b16 %v1574
    %v1639 = vunpack.c.l.b16 %v1575
    %v1640 = vunpack.c.l.b16 %v1576
    %v1641 = vunpack.c.l.b16 %v1577
    %v1642 = vunpack.c.l.b16 %v1578
    %v1643 = vpack.c.b16 %v1612, %v1611
    %v1644 = vpack.c.b16 %v1614, %v1613
    %v1645 = vpack.c.b16 %v1616, %v1615
    %v1646 = vpack.c.b16 %v1618, %v1617
    %v1647 = vpack.c.b16 %v1620, %v1619
    %v1648 = vpack.c.b16 %v1622, %v1621
    %v1649 = vpack.c.b16 %v1624, %v1623
    %v1650 = vpack.c.b16 %v1626, %v1625
    %v1651 = vpack.c.b16 %v1628, %v1627
    %v1652 = vpack.c.b16 %v1630, %v1629
    %v1653 = vpack.c.b16 %v1632, %v1631
    %v1654 = vpack.c.b16 %v1634, %v1633
    %v1655 = vpack.c.b16 %v1636, %v1635
    %v1656 = vpack.c.b16 %v1638, %v1637
    %v1657 = vpack.c.b16 %v1640, %v1639
    %v1658 = vpack.c.b16 %v1642, %v1641
    %1675 = vmatpush.bf16.msra.mxu0 %v1650
    %1676 = vmatpush.bf16.msra.mxu0 %v1649
    %1677 = vmatpush.bf16.msra.mxu0 %v1648
    %1678 = vmatpush.bf16.msra.mxu0 %v1647
    %1679 = vmatpush.bf16.msra.mxu0 %v1646
    %1680 = vmatpush.bf16.msra.mxu0 %v1645
    %1681 = vmatpush.bf16.msra.mxu0 %v1644
    %1682 = vmatpush.bf16.msra.mxu0 %v1643
    %1683 = vmatmul.bf16.gmra.mxu0 %v1389
    %v1684 = vpop.f32.mrf.mxu0
    %v1685 = vadd.f32 0.0, %v1684
    %v1686 = vpop.f32.mrf.mxu0
    %v1687 = vadd.f32 0.0, %v1686
    %1688 = vdwg.mxu0
    %1689 = vmatpush.bf16.msra.mxu0 %v1658
    %1690 = vmatpush.bf16.msra.mxu0 %v1657
    %1691 = vmatpush.bf16.msra.mxu0 %v1656
    %1692 = vmatpush.bf16.msra.mxu0 %v1655
    %1693 = vmatpush.bf16.msra.mxu0 %v1654
    %1694 = vmatpush.bf16.msra.mxu0 %v1653
    %1695 = vmatpush.bf16.msra.mxu0 %v1652
    %1696 = vmatpush.bf16.msra.mxu0 %v1651
    %1697 = vmatmul.bf16.gmra.mxu0 %v1390
    %v1698 = vpop.f32.mrf.mxu0
    %v1699 = vadd.f32 %v1685, %v1698
    %v1700 = vpop.f32.mrf.mxu0
    %v1701 = vadd.f32 %v1687, %v1700
    %1702 = vdwg.mxu0
    %v1703 = vmax.f32 %v1543, %v1699
    %v1704 = vmax.f32 %v1545, %v1701
    %v1705 = vpack.c.bf16 %v1703, %v1703
    %v1706 = vpack.c.bf16 %v1704, %v1704
    %v1707 = vld [vmem:[%s7] sm:$0xff]
    %v1708 = vld [vmem:[%s7 + $0x8] sm:$0xff]
    %v1709 = vld [vmem:[%s7 + $0x10] sm:$0xff]
    %v1710 = vld [vmem:[%s7 + $0x18] sm:$0xff]
    %v1711 = vld [vmem:[%s7 + $0x20] sm:$0xff]
    %v1712 = vld [vmem:[%s7 + $0x28] sm:$0xff]
    %v1713 = vld [vmem:[%s7 + $0x30] sm:$0xff]
    %v1714 = vld [vmem:[%s7 + $0x38] sm:$0xff]
    %v1715 = vld [vmem:[%s7 + $0x40] sm:$0xff]
    %v1716 = vld [vmem:[%s7 + $0x48] sm:$0xff]
    %v1717 = vld [vmem:[%s7 + $0x50] sm:$0xff]
    %v1718 = vld [vmem:[%s7 + $0x58] sm:$0xff]
    %v1719 = vld [vmem:[%s7 + $0x60] sm:$0xff]
    %v1720 = vld [vmem:[%s7 + $0x68] sm:$0xff]
    %v1721 = vld [vmem:[%s7 + $0x70] sm:$0xff]
    %v1722 = vld [vmem:[%s7 + $0x78] sm:$0xff]
    %s1723 = scalar_lea.vmem %s7, 128
    %v1724 = vld [vmem:[%s1723] sm:$0xff]
    %v1725 = vld [vmem:[%s1723 + $0x8] sm:$0xff]
    %v1726 = vld [vmem:[%s1723 + $0x10] sm:$0xff]
    %v1727 = vld [vmem:[%s1723 + $0x18] sm:$0xff]
    %v1728 = vld [vmem:[%s1723 + $0x20] sm:$0xff]
    %v1729 = vld [vmem:[%s1723 + $0x28] sm:$0xff]
    %v1730 = vld [vmem:[%s1723 + $0x30] sm:$0xff]
    %v1731 = vld [vmem:[%s1723 + $0x38] sm:$0xff]
    %v1732 = vld [vmem:[%s1723 + $0x40] sm:$0xff]
    %v1733 = vld [vmem:[%s1723 + $0x48] sm:$0xff]
    %v1734 = vld [vmem:[%s1723 + $0x50] sm:$0xff]
    %v1735 = vld [vmem:[%s1723 + $0x58] sm:$0xff]
    %v1736 = vld [vmem:[%s1723 + $0x60] sm:$0xff]
    %v1737 = vld [vmem:[%s1723 + $0x68] sm:$0xff]
    %v1738 = vld [vmem:[%s1723 + $0x70] sm:$0xff]
    %v1739 = vld [vmem:[%s1723 + $0x78] sm:$0xff]
    %v1742 = vunpack.c.l.b16 %v1705
    %v1743 = vunpack.c.l.b16 %v1706
    %v1744 = vpack.c.b16 %v1743, %v1742
    %v1746 = vshrl.u32 %v1744, 16
    %v1748 = vshll.u32 %v1744, 16
    %v1750 = vrot.slane %v1748, 1
    %v1751 = vor.u32 %v1746, %v1750
    %v1769 = vunpack.c.l.b16 %v1724
    %v1770 = vunpack.c.h.b16 %v1724
    %v1771 = vunpack.c.l.b16 %v1725
    %v1772 = vunpack.c.h.b16 %v1725
    %v1773 = vunpack.c.l.b16 %v1726
    %v1774 = vunpack.c.h.b16 %v1726
    %v1775 = vunpack.c.l.b16 %v1727
    %v1776 = vunpack.c.h.b16 %v1727
    %v1777 = vunpack.c.l.b16 %v1728
    %v1778 = vunpack.c.h.b16 %v1728
    %v1779 = vunpack.c.l.b16 %v1729
    %v1780 = vunpack.c.h.b16 %v1729
    %v1781 = vunpack.c.l.b16 %v1730
    %v1782 = vunpack.c.h.b16 %v1730
    %v1783 = vunpack.c.l.b16 %v1731
    %v1784 = vunpack.c.h.b16 %v1731
    %v1785 = vunpack.c.l.b16 %v1732
    %v1786 = vunpack.c.h.b16 %v1732
    %v1787 = vunpack.c.l.b16 %v1733
    %v1788 = vunpack.c.h.b16 %v1733
    %v1789 = vunpack.c.l.b16 %v1734
    %v1790 = vunpack.c.h.b16 %v1734
    %v1791 = vunpack.c.l.b16 %v1735
    %v1792 = vunpack.c.h.b16 %v1735
    %v1793 = vunpack.c.l.b16 %v1736
    %v1794 = vunpack.c.h.b16 %v1736
    %v1795 = vunpack.c.l.b16 %v1737
    %v1796 = vunpack.c.h.b16 %v1737
    %v1797 = vunpack.c.l.b16 %v1738
    %v1798 = vunpack.c.h.b16 %v1738
    %v1799 = vunpack.c.l.b16 %v1739
    %v1800 = vunpack.c.h.b16 %v1739
    %v1801 = vpack.c.b16 %v1771, %v1769
    %v1802 = vpack.c.b16 %v1772, %v1770
    %v1803 = vpack.c.b16 %v1775, %v1773
    %v1804 = vpack.c.b16 %v1776, %v1774
    %v1805 = vpack.c.b16 %v1779, %v1777
    %v1806 = vpack.c.b16 %v1780, %v1778
    %v1807 = vpack.c.b16 %v1783, %v1781
    %v1808 = vpack.c.b16 %v1784, %v1782
    %v1809 = vpack.c.b16 %v1787, %v1785
    %v1810 = vpack.c.b16 %v1788, %v1786
    %v1811 = vpack.c.b16 %v1791, %v1789
    %v1812 = vpack.c.b16 %v1792, %v1790
    %v1813 = vpack.c.b16 %v1795, %v1793
    %v1814 = vpack.c.b16 %v1796, %v1794
    %v1815 = vpack.c.b16 %v1799, %v1797
    %v1816 = vpack.c.b16 %v1800, %v1798
    %1833 = vmatpush.bf16.msra.mxu0 %v1815
    %1834 = vmatpush.bf16.msra.mxu0 %v1813
    %1835 = vmatpush.bf16.msra.mxu0 %v1811
    %1836 = vmatpush.bf16.msra.mxu0 %v1809
    %1837 = vmatpush.bf16.msra.mxu0 %v1807
    %1838 = vmatpush.bf16.msra.mxu0 %v1805
    %1839 = vmatpush.bf16.msra.mxu0 %v1803
    %1840 = vmatpush.bf16.msra.mxu0 %v1801
    %1841 = vmatmul.bf16.gmra.mxu0 %v1751
    %v1842 = vpop.f32.mrf.mxu0
    %v1843 = vadd.f32 0.0, %v1842
    %v1844 = vpop.f32.mrf.mxu0
    %v1845 = vadd.f32 0.0, %v1844
    %1846 = vdwg.mxu0
    %1847 = vmatpush.bf16.msra.mxu0 %v1816
    %1848 = vmatpush.bf16.msra.mxu0 %v1814
    %1849 = vmatpush.bf16.msra.mxu0 %v1812
    %1850 = vmatpush.bf16.msra.mxu0 %v1810
    %1851 = vmatpush.bf16.msra.mxu0 %v1808
    %1852 = vmatpush.bf16.msra.mxu0 %v1806
    %1853 = vmatpush.bf16.msra.mxu0 %v1804
    %1854 = vmatpush.bf16.msra.mxu0 %v1802
    %1855 = vmatmul.bf16.gmra.mxu0 %v1751
    %v1856 = vpop.f32.mrf.mxu0
    %v1857 = vadd.f32 0.0, %v1856
    %v1858 = vpop.f32.mrf.mxu0
    %v1859 = vadd.f32 0.0, %v1858
    %1860 = vdwg.mxu0
    %v1878 = vunpack.c.l.b16 %v1707
    %v1879 = vunpack.c.h.b16 %v1707
    %v1880 = vunpack.c.l.b16 %v1708
    %v1881 = vunpack.c.h.b16 %v1708
    %v1882 = vunpack.c.l.b16 %v1709
    %v1883 = vunpack.c.h.b16 %v1709
    %v1884 = vunpack.c.l.b16 %v1710
    %v1885 = vunpack.c.h.b16 %v1710
    %v1886 = vunpack.c.l.b16 %v1711
    %v1887 = vunpack.c.h.b16 %v1711
    %v1888 = vunpack.c.l.b16 %v1712
    %v1889 = vunpack.c.h.b16 %v1712
    %v1890 = vunpack.c.l.b16 %v1713
    %v1891 = vunpack.c.h.b16 %v1713
    %v1892 = vunpack.c.l.b16 %v1714
    %v1893 = vunpack.c.h.b16 %v1714
    %v1894 = vunpack.c.l.b16 %v1715
    %v1895 = vunpack.c.h.b16 %v1715
    %v1896 = vunpack.c.l.b16 %v1716
    %v1897 = vunpack.c.h.b16 %v1716
    %v1898 = vunpack.c.l.b16 %v1717
    %v1899 = vunpack.c.h.b16 %v1717
    %v1900 = vunpack.c.l.b16 %v1718
    %v1901 = vunpack.c.h.b16 %v1718
    %v1902 = vunpack.c.l.b16 %v1719
    %v1903 = vunpack.c.h.b16 %v1719
    %v1904 = vunpack.c.l.b16 %v1720
    %v1905 = vunpack.c.h.b16 %v1720
    %v1906 = vunpack.c.l.b16 %v1721
    %v1907 = vunpack.c.h.b16 %v1721
    %v1908 = vunpack.c.l.b16 %v1722
    %v1909 = vunpack.c.h.b16 %v1722
    %v1910 = vpack.c.b16 %v1880, %v1878
    %v1911 = vpack.c.b16 %v1881, %v1879
    %v1912 = vpack.c.b16 %v1884, %v1882
    %v1913 = vpack.c.b16 %v1885, %v1883
    %v1914 = vpack.c.b16 %v1888, %v1886
    %v1915 = vpack.c.b16 %v1889, %v1887
    %v1916 = vpack.c.b16 %v1892, %v1890
    %v1917 = vpack.c.b16 %v1893, %v1891
    %v1918 = vpack.c.b16 %v1896, %v1894
    %v1919 = vpack.c.b16 %v1897, %v1895
    %v1920 = vpack.c.b16 %v1900, %v1898
    %v1921 = vpack.c.b16 %v1901, %v1899
    %v1922 = vpack.c.b16 %v1904, %v1902
    %v1923 = vpack.c.b16 %v1905, %v1903
    %v1924 = vpack.c.b16 %v1908, %v1906
    %v1925 = vpack.c.b16 %v1909, %v1907
    %1942 = vmatpush.bf16.msra.mxu0 %v1924
    %1943 = vmatpush.bf16.msra.mxu0 %v1922
    %1944 = vmatpush.bf16.msra.mxu0 %v1920
    %1945 = vmatpush.bf16.msra.mxu0 %v1918
    %1946 = vmatpush.bf16.msra.mxu0 %v1916
    %1947 = vmatpush.bf16.msra.mxu0 %v1914
    %1948 = vmatpush.bf16.msra.mxu0 %v1912
    %1949 = vmatpush.bf16.msra.mxu0 %v1910
    %1950 = vmatmul.bf16.gmra.mxu0 %v1744
    %v1951 = vpop.f32.mrf.mxu0
    %v1952 = vadd.f32 %v1843, %v1951
    %v1953 = vpop.f32.mrf.mxu0
    %v1954 = vadd.f32 %v1845, %v1953
    %1955 = vdwg.mxu0
    %1956 = vmatpush.bf16.msra.mxu0 %v1925
    %1957 = vmatpush.bf16.msra.mxu0 %v1923
    %1958 = vmatpush.bf16.msra.mxu0 %v1921
    %1959 = vmatpush.bf16.msra.mxu0 %v1919
    %1960 = vmatpush.bf16.msra.mxu0 %v1917
    %1961 = vmatpush.bf16.msra.mxu0 %v1915
    %1962 = vmatpush.bf16.msra.mxu0 %v1913
    %1963 = vmatpush.bf16.msra.mxu0 %v1911
    %1964 = vmatmul.bf16.gmra.mxu0 %v1744
    %v1965 = vpop.f32.mrf.mxu0
    %v1966 = vadd.f32 %v1857, %v1965
    %v1967 = vpop.f32.mrf.mxu0
    %v1968 = vadd.f32 %v1859, %v1967
    %1969 = vdwg.mxu0
    %s1970 = scalar_lea.vmem %s7, 256
    %v1971 = vld [vmem:[%s1970] sm:$0xff]
    %v1972 = vld [vmem:[%s1970 + $0x8] sm:$0xff]
    %v1973 = vld [vmem:[%s1970 + $0x10] sm:$0xff]
    %v1974 = vld [vmem:[%s1970 + $0x18] sm:$0xff]
    %v1975 = vld [vmem:[%s1970 + $0x20] sm:$0xff]
    %v1976 = vld [vmem:[%s1970 + $0x28] sm:$0xff]
    %v1977 = vld [vmem:[%s1970 + $0x30] sm:$0xff]
    %v1978 = vld [vmem:[%s1970 + $0x38] sm:$0xff]
    %v1979 = vld [vmem:[%s1970 + $0x40] sm:$0xff]
    %v1980 = vld [vmem:[%s1970 + $0x48] sm:$0xff]
    %v1981 = vld [vmem:[%s1970 + $0x50] sm:$0xff]
    %v1982 = vld [vmem:[%s1970 + $0x58] sm:$0xff]
    %v1983 = vld [vmem:[%s1970 + $0x60] sm:$0xff]
    %v1984 = vld [vmem:[%s1970 + $0x68] sm:$0xff]
    %v1985 = vld [vmem:[%s1970 + $0x70] sm:$0xff]
    %v1986 = vld [vmem:[%s1970 + $0x78] sm:$0xff]
    %v1987 = vrot.slane %v1744, 1
    %v2005 = vunpack.c.l.b16 %v1971
    %v2006 = vunpack.c.h.b16 %v1971
    %v2007 = vunpack.c.l.b16 %v1972
    %v2008 = vunpack.c.h.b16 %v1972
    %v2009 = vunpack.c.l.b16 %v1973
    %v2010 = vunpack.c.h.b16 %v1973
    %v2011 = vunpack.c.l.b16 %v1974
    %v2012 = vunpack.c.h.b16 %v1974
    %v2013 = vunpack.c.l.b16 %v1975
    %v2014 = vunpack.c.h.b16 %v1975
    %v2015 = vunpack.c.l.b16 %v1976
    %v2016 = vunpack.c.h.b16 %v1976
    %v2017 = vunpack.c.l.b16 %v1977
    %v2018 = vunpack.c.h.b16 %v1977
    %v2019 = vunpack.c.l.b16 %v1978
    %v2020 = vunpack.c.h.b16 %v1978
    %v2021 = vunpack.c.l.b16 %v1979
    %v2022 = vunpack.c.h.b16 %v1979
    %v2023 = vunpack.c.l.b16 %v1980
    %v2024 = vunpack.c.h.b16 %v1980
    %v2025 = vunpack.c.l.b16 %v1981
    %v2026 = vunpack.c.h.b16 %v1981
    %v2027 = vunpack.c.l.b16 %v1982
    %v2028 = vunpack.c.h.b16 %v1982
    %v2029 = vunpack.c.l.b16 %v1983
    %v2030 = vunpack.c.h.b16 %v1983
    %v2031 = vunpack.c.l.b16 %v1984
    %v2032 = vunpack.c.h.b16 %v1984
    %v2033 = vunpack.c.l.b16 %v1985
    %v2034 = vunpack.c.h.b16 %v1985
    %v2035 = vunpack.c.l.b16 %v1986
    %v2036 = vunpack.c.h.b16 %v1986
    %v2037 = vpack.c.b16 %v2007, %v2005
    %v2038 = vpack.c.b16 %v2008, %v2006
    %v2039 = vpack.c.b16 %v2011, %v2009
    %v2040 = vpack.c.b16 %v2012, %v2010
    %v2041 = vpack.c.b16 %v2015, %v2013
    %v2042 = vpack.c.b16 %v2016, %v2014
    %v2043 = vpack.c.b16 %v2019, %v2017
    %v2044 = vpack.c.b16 %v2020, %v2018
    %v2045 = vpack.c.b16 %v2023, %v2021
    %v2046 = vpack.c.b16 %v2024, %v2022
    %v2047 = vpack.c.b16 %v2027, %v2025
    %v2048 = vpack.c.b16 %v2028, %v2026
    %v2049 = vpack.c.b16 %v2031, %v2029
    %v2050 = vpack.c.b16 %v2032, %v2030
    %v2051 = vpack.c.b16 %v2035, %v2033
    %v2052 = vpack.c.b16 %v2036, %v2034
    %2069 = vmatpush.bf16.msra.mxu0 %v2051
    %2070 = vmatpush.bf16.msra.mxu0 %v2049
    %2071 = vmatpush.bf16.msra.mxu0 %v2047
    %2072 = vmatpush.bf16.msra.mxu0 %v2045
    %2073 = vmatpush.bf16.msra.mxu0 %v2043
    %2074 = vmatpush.bf16.msra.mxu0 %v2041
    %2075 = vmatpush.bf16.msra.mxu0 %v2039
    %2076 = vmatpush.bf16.msra.mxu0 %v2037
    %2077 = vmatmul.bf16.gmra.mxu0 %v1987
    %v2078 = vpop.f32.mrf.mxu0
    %v2079 = vadd.f32 0.0, %v2078
    %v2080 = vpop.f32.mrf.mxu0
    %v2081 = vadd.f32 0.0, %v2080
    %2082 = vdwg.mxu0
    %2083 = vmatpush.bf16.msra.mxu0 %v2052
    %2084 = vmatpush.bf16.msra.mxu0 %v2050
    %2085 = vmatpush.bf16.msra.mxu0 %v2048
    %2086 = vmatpush.bf16.msra.mxu0 %v2046
    %2087 = vmatpush.bf16.msra.mxu0 %v2044
    %2088 = vmatpush.bf16.msra.mxu0 %v2042
    %2089 = vmatpush.bf16.msra.mxu0 %v2040
    %2090 = vmatpush.bf16.msra.mxu0 %v2038
    %2091 = vmatmul.bf16.gmra.mxu0 %v1987
    %v2092 = vpop.f32.mrf.mxu0
    %v2093 = vadd.f32 0.0, %v2092
    %v2094 = vpop.f32.mrf.mxu0
    %v2095 = vadd.f32 0.0, %v2094
    %2096 = vdwg.mxu0
    %v2097 = vadd.f32 %v1952, %v2079
    %v2098 = vadd.f32 %v1966, %v2093
    %v2099 = vadd.f32 %v1954, %v2081
    %v2100 = vadd.f32 %v1968, %v2095
    %v2101 = vld [vmem:[%s8] sm:$0x3]
    %v2103 = vperm.slane %v2101, 0
    %v2104 = vperm.slane %v2101, 1
    %v2107 = vmul.f32 %v2097, %v2103
    %v2108 = vmul.f32 %v2098, %v2104
    %v2109 = vmul.f32 %v2099, %v2103
    %v2110 = vmul.f32 %v2100, %v2104
    %v2111 = vld [vmem:[%s9] sm:$0x3]
    %v2113 = vperm.slane %v2111, 0
    %v2114 = vperm.slane %v2111, 1
    %v2117 = vadd.f32 %v2107, %v2113
    %v2118 = vadd.f32 %v2108, %v2114
    %v2119 = vadd.f32 %v2109, %v2113
    %v2120 = vadd.f32 %v2110, %v2114
    %v2121 = vmax.f32 %v2117, 0.0
    %v2122 = vmax.f32 %v2118, 0.0
    %v2123 = vmax.f32 %v2119, 0.0
    %v2124 = vmax.f32 %v2120, 0.0
    %2127 = vrot.lane.b32.xlu0 %v2121, 64
    %v2128 = vpop.permute.xlu0 %2127
    %2129 = vrot.lane.b32.xlu0 %v2123, 64
    %v2130 = vpop.permute.xlu0 %2129
    %v2133 = vmax.f32 %v2121, %v2128
    %v2134 = vmax.f32 %v2123, %v2130
    %v2135 = vmax.f32 %v2133, %v2122
    %v2136 = vmax.f32 %v2134, %v2124
    %2139 = vrot.lane.b32.xlu0 %v2122, 64
    %v2140 = vpop.permute.xlu0 %2139
    %2141 = vrot.lane.b32.xlu0 %v2124, 64
    %v2142 = vpop.permute.xlu0 %2141
    %v2145 = vmax.f32 %v2135, %v2140
    %v2146 = vmax.f32 %v2136, %v2142
    %vm2147 = vcmask 519168
    %v2148 = vsel %vm2147, %v2145, -inf
    %v2149 = vrot.slane %v2148, 4
    %v2150 = vmax.f32 %v2148, %v2149
    %v2151 = vrot.slane %v2150, 2
    %v2152 = vmax.f32 %v2150, %v2151
    %v2153 = vrot.slane %v2152, 1
    %v2154 = vmax.f32 %v2152, %v2153
    %vm2155 = vcmask 523270
    %v2156 = vsel %vm2155, %v2145, -inf
    %vm2157 = vcmask 517120
    %v2158 = vsel %vm2157, %v2146, -inf
    %v2159 = vmax.f32 %v2156, %v2158
    %v2160 = vrot.slane %v2159, 4
    %v2161 = vmax.f32 %v2159, %v2160
    %v2162 = vrot.slane %v2161, 2
    %v2163 = vmax.f32 %v2161, %v2162
    %v2164 = vrot.slane %v2163, 1
    %v2165 = vmax.f32 %v2163, %v2164
    %v2166 = vsel %vm392, %v2154, %v2165
    %v2167 = vld [vmem:[%s18] sm:$0xff]
    %v2168 = vld [vmem:[%s18 + $0x8] sm:$0xff]
    %v2169 = vld [vmem:[%s18 + $0x10] sm:$0xff]
    %v2170 = vld [vmem:[%s18 + $0x18] sm:$0xff]
    %v2171 = vld [vmem:[%s18 + $0x20] sm:$0xff]
    %v2172 = vld [vmem:[%s18 + $0x28] sm:$0xff]
    %v2173 = vld [vmem:[%s18 + $0x30] sm:$0xff]
    %v2174 = vld [vmem:[%s18 + $0x38] sm:$0xff]
    %v2175 = vld [vmem:[%s19] sm:$0x1]
    %v2177 = vperm.slane %v2175, 0
    %vm2179 = vcmask 523264
    %v2181 = vsel %vm2179, %v2166, 0
    %2183 = vmatpush.msra.mxu0 0.0
    %2184 = vmatpush.msra.mxu0 0.0
    %2185 = vmatpush.msra.mxu0 0.0
    %2186 = vmatpush.msra.mxu0 0.0
    %2187 = vmatpush.msra.mxu0 0.0
    %2188 = vmatpush.msra.mxu0 0.0
    %2189 = vmatpush.msra.mxu0 0.0
    %2190 = vmatpush.msra.mxu0 0.0
    %2191 = vmatpush.msra.mxu0 %v2174
    %2192 = vmatpush.msra.mxu0 %v2173
    %2193 = vmatpush.msra.mxu0 %v2172
    %2194 = vmatpush.msra.mxu0 %v2171
    %2195 = vmatpush.msra.mxu0 %v2170
    %2196 = vmatpush.msra.mxu0 %v2169
    %2197 = vmatpush.msra.mxu0 %v2168
    %2198 = vmatpush.msra.mxu0 %v2167
    %2199 = vmatmul.f32.gmra.mxu0 %v2181
    %v2200 = vpop.f32.mrf.mxu0
    %v2201 = vadd.f32 %v2177, %v2200
    %2202 = vdwg.mxu0
    %vm2203 = vcmask 33792
    %2204 = vst.msk [vmem:[#allocation2] sm:$0x3] %vm2203, %v2201
    // Predicated region
    $region82: #{accent_cnn_forward.1} parent=1 // pred_check
      _
    $region83: #{accent_cnn_forward.1} parent=1 // pred_check_branch
      %2206 = sbr.rel (0) target = $region85
    $region84: #{accent_cnn_forward.1} parent=1 // pred_region
      %2208 = vsyncadd [#allocation3], 0
      %s2210 = sshll.u32 [#allocation2], 4
      %s2211 = int_to_ptr.vmem [resolvable:$true] %s2210
      %s2212 = sshll.u32 %s20, 4
      %s2213 = int_to_ptr.hbm [resolvable:$true] %s2212
      %2215 = dma.vmem_to_hbm [thread:$0]  %s2211, 32, %s2213, [#allocation3]
    $region85: #{accent_cnn_forward.1} parent=1 // pred_fallthru
      _
    // Predicated region
    $region86: #{accent_cnn_forward.1} parent=1 // pred_check
      _
    $region87: #{accent_cnn_forward.1} parent=1 // pred_check_branch
      %2217 = sbr.rel (0) target = $region89
    $region88: #{accent_cnn_forward.1} parent=1 // pred_region
      %2219 = dma.done [#allocation3], 32
    $region89: #{accent_cnn_forward.1} parent=1 // pred_fallthru
      _
    %2220 = vsyncpa [#allocation3], 1

</llo_original>
